<compile_context>
chip_gen: v6e
topology: v6e:2x2x1
jax: 0.10.0
libtpu: 0.0.40
codegen_flags: <defaults>
</compile_context>

<pallas_src>
import jax
import jax.numpy as jnp
from jax.experimental import pallas as pl
from jax.experimental.pallas import tpu as pltpu


def _round_up(x, m):
    return (x + m - 1) // m * m


def _make_kernel(*, symmetric, inv_n, h_feats):
    """Build the row-tiled kernel body (static config baked in)."""

    def kernel(adj_ref, ncol_ref, nrow_ref, feat_ref, w1_ref, b1_ref,
               w2_ref, b2_ref, out_ref, zc_ref, acc_ref, *extra):
        i = pl.program_id(0)
        n_tiles = pl.num_programs(0)
        tm = adj_ref.shape[0]

        # ---- init (once): hoist z = (X @ W1) * n, append n as an extra RHS column.
        @pl.when(i == 0)
        def _init():
            z = jnp.dot(feat_ref[...], w1_ref[...],
                        preferred_element_type=jnp.float32)          # (N, h)
            z = z * ncol_ref[...]                                     # diag(n) X W1
            zc_ref[:, :h_feats] = z.astype(zc_ref.dtype)
            zc_ref[:, h_feats:] = ncol_ref[...].astype(zc_ref.dtype)  # extra column = n
            acc_ref[...] = jnp.zeros_like(acc_ref)
            if not symmetric:
                extra[1][...] = jnp.zeros_like(extra[1])              # col-sum scratch

        row0 = pl.multiple_of(i * tm, 128)
        ncol_t = ncol_ref[pl.ds(row0, tm), :]                         # (tm, 1) deg^-1/2

        # ---- the one adj pass: A_tile @ [z | n] on the MXU (bf16 x bf16 -> f32).
        adj_t = adj_ref[...].astype(jnp.bfloat16)                     # 0/1 exact in bf16
        az = jnp.dot(adj_t, zc_ref[...],
                     preferred_element_type=jnp.float32)              # (tm, h+1)

        # conv1 epilogue for this row tile.
        h1 = jnp.maximum(az[:, :h_feats] * ncol_t + b1_ref[...], 0.0)  # (tm, h)

        if symmetric:
            # c[j] = (n^T A)[j] == (A n)[j] for symmetric adj -> last matmul column.
            c = az[:, h_feats:]                                       # (tm, 1)
            w = ncol_t * c * inv_n                                    # (tm, 1)
            acc_ref[...] += jnp.sum(h1 * w, axis=0, keepdims=True)    # (1, h)
        else:
            # Guarded fallback (no symmetry assumption): keep h1 and accumulate the
            # norm-weighted column sums of adj (VPU mul + sublane reduce).
            h1_ref, csum_ref = extra
            h1_ref[pl.ds(row0, tm), :] = h1
            csum_ref[...] += jnp.sum(adj_ref[...].astype(jnp.float32) * ncol_t,
                                     axis=0, keepdims=True)           # (1, N)

        # ---- finalize (once): tiny (1,h)@(h,C) matmul + bias.
        @pl.when(i == n_tiles - 1)
        def _fini():
            if symmetric:
                g = acc_ref[...]                                      # (1, h)
            else:
                h1_ref, csum_ref = extra
                m = csum_ref[...] * nrow_ref[...] * inv_n             # (1, N)
                g = jnp.dot(m, h1_ref[...],
                            preferred_element_type=jnp.float32)       # (1, h)
            out_ref[...] = (jnp.dot(g, w2_ref[...],
                                    preferred_element_type=jnp.float32)
                            + b2_ref[...])                            # (1, classes)

    return kernel


def sparse_gcn_forward(adj, norm, features, w1, b1, w2, b2, *,
                       symmetric_adj=True, tile_rows=None):
    """SparseGCN forward.

    adj: (N, N) adjacency in its stored dtype (bf16/f32/...; 0/1 values),
    norm: (N,) deg^-1/2, features: (N, in_feats) -> (1, num_classes).
    symmetric_adj=True uses the single-pass fused path (standard sym-normalized GCN);
    set False for directed / non-symmetric adjacency (slower guarded fallback).
    """
    n = adj.shape[0]
    in_feats = features.shape[1]
    h_feats = w1.shape[1]
    num_classes = w2.shape[1]
    adj_itemsize = jnp.dtype(adj.dtype).itemsize

    # ---- tile-size choice: keep the double-buffered adj stream <= ~24 MiB.
    n_lane = _round_up(n, 128)
    if tile_rows is None:
        tile_rows = 512
        while tile_rows > 128 and 2 * tile_rows * n_lane * adj_itemsize > (24 << 20):
            tile_rows //= 2
    tm = _round_up(min(int(tile_rows), n_lane), 128)
    n_pad = _round_up(n, tm)
    n_tiles = n_pad // tm
    pad = n_pad - n

    # ---- operand prep (no f32 copy of adj; padded rows/cols contribute 0 by construction).
    if pad:
        adj = jnp.pad(adj, ((0, pad), (0, pad)))
    norm_p = jnp.pad(jnp.ravel(norm).astype(jnp.float32), (0, pad))
    ncol = norm_p.reshape(n_pad, 1)
    nrow = norm_p.reshape(1, n_pad)
    feat = jnp.pad(features.astype(jnp.float32), ((0, pad), (0, 0)))
    w1f = w1.astype(jnp.float32)
    w2f = w2.astype(jnp.float32)
    b1f = b1.reshape(1, -1).astype(jnp.float32)
    b2f = b2.reshape(1, -1).astype(jnp.float32)

    kernel = _make_kernel(symmetric=bool(symmetric_adj), inv_n=1.0 / float(n),
                          h_feats=h_feats)

    in_specs = [
        pl.BlockSpec((tm, n_pad), lambda i: (i, 0)),          # adj: streamed row tiles
        pl.BlockSpec((n_pad, 1), lambda i: (0, 0)),           # norm column (resident)
        pl.BlockSpec((1, n_pad), lambda i: (0, 0)),           # norm row (fallback path)
        pl.BlockSpec((n_pad, in_feats), lambda i: (0, 0)),    # features (resident)
        pl.BlockSpec((in_feats, h_feats), lambda i: (0, 0)),  # W1
        pl.BlockSpec((1, h_feats), lambda i: (0, 0)),         # b1
        pl.BlockSpec((h_feats, num_classes), lambda i: (0, 0)),  # W2
        pl.BlockSpec((1, num_classes), lambda i: (0, 0)),     # b2
    ]
    out_spec = pl.BlockSpec((1, num_classes), lambda i: (0, 0))

    scratch = [
        pltpu.VMEM((n_pad, h_feats + 1), jnp.bfloat16),       # zc = [ (X W1)*n | n ]
        pltpu.VMEM((1, h_feats), jnp.float32),                # fused mean accumulator
    ]
    if not symmetric_adj:
        scratch += [
            pltpu.VMEM((n_pad, h_feats), jnp.float32),        # h1 (full, small)
            pltpu.VMEM((1, n_pad), jnp.float32),              # norm-weighted col sums
        ]

    # ---- VMEM budget (explicit so v5e's 16 MiB default / v7x's 64 MiB phys are handled).
    adj_stream = 2 * tm * n_pad * adj_itemsize
    resident = (n_pad * in_feats * 4 + n_pad * (h_feats + 1) * 2 + 2 * n_pad * 4
                + (in_feats + 2) * h_feats * 4 + (h_feats + 2) * num_classes * 4)
    if not symmetric_adj:
        resident += n_pad * h_feats * 4 + n_pad * 4
    vmem_limit = int(min(max(adj_stream + resident + (2 << 20), 16 << 20), 64 << 20))

    cost = pl.CostEstimate(
        flops=int(2 * n_pad * n_pad * (h_feats + 1)
                  + 2 * n_pad * in_feats * h_feats + 2 * h_feats * num_classes),
        transcendentals=0,
        bytes_accessed=int(n_pad * n_pad * adj_itemsize + n_pad * (in_feats + 2) * 4
                           + (in_feats + 1) * h_feats * 4
                           + (h_feats + 1) * num_classes * 4 + num_classes * 4),
    )

    return pl.pallas_call(
        kernel,
        out_shape=jax.ShapeDtypeStruct((1, num_classes), jnp.float32),
        grid_spec=pltpu.PrefetchScalarGridSpec(
            num_scalar_prefetch=0,
            grid=(n_tiles,),
            in_specs=in_specs,
            out_specs=out_spec,
            scratch_shapes=scratch),
        compiler_params=pltpu.CompilerParams(
            dimension_semantics=("arbitrary",),   # row axis is a reduction into acc
            vmem_limit_bytes=vmem_limit),
        cost_estimate=cost,
    )(adj, ncol, nrow, feat, w1f, b1f, w2f, b2f)


def reference_forward(adj, norm, features, w1, b1, w2, b2):
    """Pure-JAX f32 reference of the PyTorch module's forward."""
    adj_n = adj * norm[:, None] * norm[None, :]
    h = jnp.maximum(adj_n @ features @ w1 + b1, 0.0)
    h = adj_n @ h @ w2 + b2
    return jnp.mean(h, axis=0, keepdims=True)


if __name__ == "__main__":
    # Small deterministic shapes; N deliberately not a multiple of the tile to
    # exercise padding, and tile_rows=128 to exercise a multi-step grid.
    N, in_feats, h_feats, num_classes = 300, 32, 16, 8

    key = jax.random.PRNGKey(0)
    k_adj, k_feat, k_w1, k_b1, k_w2, k_b2 = jax.random.split(key, 6)

    rand = jax.random.uniform(k_adj, (N, N))
    adj_dir = jnp.where(rand < 0.08, 1.0, 0.0)
    adj_dir = jnp.maximum(adj_dir, jnp.eye(N, dtype=jnp.float32))   # directed + self loops
    adj_sym = jnp.maximum(adj_dir, adj_dir.T)                       # undirected + self loops

    features = jax.random.normal(k_feat, (N, in_feats), dtype=jnp.float32)
    w1 = jax.random.normal(k_w1, (in_feats, h_feats), dtype=jnp.float32)
    b1 = jax.random.normal(k_b1, (h_feats,), dtype=jnp.float32)
    w2 = jax.random.normal(k_w2, (h_feats, num_classes), dtype=jnp.float32)
    b2 = jax.random.normal(k_b2, (num_classes,), dtype=jnp.float32)

    def inv_sqrt_deg(a):
        return 1.0 / jnp.sqrt(jnp.sum(a, axis=1))

    # 1) Standard symmetric GCN adjacency -> fused single-pass path.
    #    adj is stored upstream as bf16 (0/1 exact); kernel never makes an f32 copy.
    norm_s = inv_sqrt_deg(adj_sym)
    out_s = sparse_gcn_forward(adj_sym.astype(jnp.bfloat16), norm_s, features,
                               w1, b1, w2, b2, symmetric_adj=True, tile_rows=128)
    out_s = jax.block_until_ready(out_s)
    ref_s = reference_forward(adj_sym, norm_s, features, w1, b1, w2, b2)
    assert out_s.shape == (1, num_classes)
    # Tolerance loosened vs pure-f32 because z / adj travel through the MXU in bf16.
    assert jnp.allclose(out_s, ref_s, atol=5e-2, rtol=2e-2), (out_s, ref_s)

    # 2) Non-symmetric adjacency -> guarded fallback path (no symmetry assumption).
    norm_d = inv_sqrt_deg(adj_dir)
    out_d = sparse_gcn_forward(adj_dir.astype(jnp.bfloat16), norm_d, features,
                               w1, b1, w2, b2, symmetric_adj=False, tile_rows=128)
    out_d = jax.block_until_ready(out_d)
    ref_d = reference_forward(adj_dir, norm_d, features, w1, b1, w2, b2)
    assert jnp.allclose(out_d, ref_d, atol=5e-2, rtol=2e-2), (out_d, ref_d)

    print("KERNEL_OK")
</pallas_src>

<mosaic_0001>
module attributes {stable_mosaic.version = 11 : i64} {
  func.func @kernel(%arg0: i32, %arg1: memref<128x384xbf16, #tpu.memory_space<vmem>>, %arg2: memref<384x1xf32, #tpu.memory_space<vmem>>, %arg3: memref<1x384xf32, #tpu.memory_space<vmem>>, %arg4: memref<384x32xf32, #tpu.memory_space<vmem>>, %arg5: memref<32x16xf32, #tpu.memory_space<vmem>>, %arg6: memref<1x16xf32, #tpu.memory_space<vmem>>, %arg7: memref<16x8xf32, #tpu.memory_space<vmem>>, %arg8: memref<1x8xf32, #tpu.memory_space<vmem>>, %arg9: memref<1x8xf32, #tpu.memory_space<vmem>>, %arg10: memref<384x17xbf16, #tpu.memory_space<vmem>>, %arg11: memref<1x16xf32, #tpu.memory_space<vmem>>) attributes {dimension_semantics = [#tpu.dimension_semantics<arbitrary>], iteration_bounds = array<i64: 3>, scalar_prefetch = 0 : i64, scratch_operands = 2 : i64, tpu.core_type = #tpu.core_type<tc>, window_params = [{transform_indices = @transform_0, window_bounds = array<i64: 128, 384>}, {pipeline_mode = #tpu.pipeline_mode<synchronous>, transform_indices = @transform_1, window_bounds = array<i64: 384, 1>}, {pipeline_mode = #tpu.pipeline_mode<synchronous>, transform_indices = @transform_2, window_bounds = array<i64: 1, 384>}, {pipeline_mode = #tpu.pipeline_mode<synchronous>, transform_indices = @transform_3, window_bounds = array<i64: 384, 32>}, {pipeline_mode = #tpu.pipeline_mode<synchronous>, transform_indices = @transform_4, window_bounds = array<i64: 32, 16>}, {pipeline_mode = #tpu.pipeline_mode<synchronous>, transform_indices = @transform_5, window_bounds = array<i64: 1, 16>}, {pipeline_mode = #tpu.pipeline_mode<synchronous>, transform_indices = @transform_6, window_bounds = array<i64: 16, 8>}, {pipeline_mode = #tpu.pipeline_mode<synchronous>, transform_indices = @transform_7, window_bounds = array<i64: 1, 8>}, {pipeline_mode = #tpu.pipeline_mode<synchronous>, transform_indices = @transform_8, window_bounds = array<i64: 1, 8>}]} {
    %c0_i32 = arith.constant 0 : i32
    %0 = arith.cmpi eq, %arg0, %c0_i32 : i32
    %1 = arith.extui %0 : i1 to i32
    %c0_i32_0 = arith.constant 0 : i32
    %2 = arith.cmpi ne, %1, %c0_i32_0 : i32
    scf.if %2 {
      %c0_15 = arith.constant 0 : index
      %c0_16 = arith.constant 0 : index
      %32 = vector.load %arg4[%c0_15, %c0_16] : memref<384x32xf32, #tpu.memory_space<vmem>>, vector<384x32xf32>
      %c0_17 = arith.constant 0 : index
      %c0_18 = arith.constant 0 : index
      %33 = vector.load %arg5[%c0_17, %c0_18] : memref<32x16xf32, #tpu.memory_space<vmem>>, vector<32x16xf32>
      %cst_19 = arith.constant dense<0.000000e+00> : vector<384x16xf32>
      %34 = tpu.matmul %32, %33, %cst_19 {dimension_numbers = #tpu.dot_dimension_numbers<[1], [0], [0], [1], [0, 0, 1, 1], [], []>} : vector<384x32xf32>, vector<32x16xf32>, vector<384x16xf32> -> vector<384x16xf32>
      %c0_20 = arith.constant 0 : index
      %c0_21 = arith.constant 0 : index
      %35 = vector.load %arg2[%c0_20, %c0_21] : memref<384x1xf32, #tpu.memory_space<vmem>>, vector<384x1xf32>
      %36 = vector.broadcast %35 : vector<384x1xf32> to vector<384x16xf32>
      %37 = arith.mulf %34, %36 : vector<384x16xf32>
      %38 = arith.truncf %37 : vector<384x16xf32> to vector<384x16xbf16>
      %c0_22 = arith.constant 0 : index
      %c0_23 = arith.constant 0 : index
      %39 = vector.load %arg10[%c0_22, %c0_23] : memref<384x17xbf16, #tpu.memory_space<vmem>>, vector<384x16xbf16>
      tpu.vector_store %arg10[%c0_22, %c0_23], %38 {strides = array<i32>} : memref<384x17xbf16, #tpu.memory_space<vmem>>, vector<384x16xbf16>,
      %c0_24 = arith.constant 0 : index
      %c0_25 = arith.constant 0 : index
      %40 = vector.load %arg2[%c0_24, %c0_25] : memref<384x1xf32, #tpu.memory_space<vmem>>, vector<384x1xf32>
      %41 = arith.truncf %40 : vector<384x1xf32> to vector<384x1xbf16>
      %c0_26 = arith.constant 0 : index
      %c16 = arith.constant 16 : index
      %42 = vector.load %arg10[%c0_26, %c16] : memref<384x17xbf16, #tpu.memory_space<vmem>>, vector<384x1xbf16>
      tpu.vector_store %arg10[%c0_26, %c16], %41 {strides = array<i32>} : memref<384x17xbf16, #tpu.memory_space<vmem>>, vector<384x1xbf16>,
      %cst_27 = arith.constant 0.000000e+00 : f32
      %43 = vector.broadcast %cst_27 : f32 to vector<1x16xf32>
      %c0_28 = arith.constant 0 : index
      %c0_29 = arith.constant 0 : index
      %44 = vector.load %arg11[%c0_28, %c0_29] : memref<1x16xf32, #tpu.memory_space<vmem>>, vector<1x16xf32>
      tpu.vector_store %arg11[%c0_28, %c0_29], %43 {strides = array<i32>} : memref<1x16xf32, #tpu.memory_space<vmem>>, vector<1x16xf32>,
    } else {
    }
    %c128_i32 = arith.constant 128 : i32
    %3 = arith.muli %arg0, %c128_i32 : i32
    %4 = tpu.assume_multiple %3, 128 : i32
    %5 = arith.index_cast %4 : i32 to index
    %c0 = arith.constant 0 : index
    %6 = vector.load %arg2[%5, %c0] : memref<384x1xf32, #tpu.memory_space<vmem>>, vector<128x1xf32>
    %c0_1 = arith.constant 0 : index
    %c0_2 = arith.constant 0 : index
    %7 = vector.load %arg1[%c0_1, %c0_2] : memref<128x384xbf16, #tpu.memory_space<vmem>>, vector<128x384xbf16>
    %c0_3 = arith.constant 0 : index
    %c0_4 = arith.constant 0 : index
    %8 = vector.load %arg10[%c0_3, %c0_4] : memref<384x17xbf16, #tpu.memory_space<vmem>>, vector<384x17xbf16>
    %cst = arith.constant dense<0.000000e+00> : vector<128x17xf32>
    %9 = tpu.matmul %7, %8, %cst {dimension_numbers = #tpu.dot_dimension_numbers<[1], [0], [0], [1], [0, 0, 1, 1], [], []>} : vector<128x384xbf16>, vector<384x17xbf16>, vector<128x17xf32> -> vector<128x17xf32>
    %10 = vector.extract_strided_slice %9 {offsets = [0, 0], sizes = [128, 16], strides = [1, 1]} : vector<128x17xf32> to vector<128x16xf32>
    %11 = vector.broadcast %6 : vector<128x1xf32> to vector<128x16xf32>
    %12 = arith.mulf %10, %11 : vector<128x16xf32>
    %c0_5 = arith.constant 0 : index
    %c0_6 = arith.constant 0 : index
    %13 = vector.load %arg6[%c0_5, %c0_6] : memref<1x16xf32, #tpu.memory_space<vmem>>, vector<1x16xf32>
    %14 = vector.broadcast %13 : vector<1x16xf32> to vector<128x16xf32>
    %15 = arith.addf %12, %14 : vector<128x16xf32>
    %cst_7 = arith.constant 0.000000e+00 : f32
    %16 = vector.broadcast %cst_7 : f32 to vector<128x16xf32>
    %17 = arith.maximumf %15, %16 : vector<128x16xf32>
    %18 = vector.extract_strided_slice %9 {offsets = [0, 16], sizes = [128, 1], strides = [1, 1]} : vector<128x17xf32> to vector<128x1xf32>
    %19 = arith.mulf %6, %18 : vector<128x1xf32>
    %cst_8 = arith.constant 0.00333333341 : f32
    %20 = vector.broadcast %cst_8 : f32 to vector<128x1xf32>
    %21 = arith.mulf %19, %20 : vector<128x1xf32>
    %c0_9 = arith.constant 0 : index
    %c0_10 = arith.constant 0 : index
    %22 = vector.load %arg11[%c0_9, %c0_10] : memref<1x16xf32, #tpu.memory_space<vmem>>, vector<1x16xf32>
    %23 = vector.broadcast %21 : vector<128x1xf32> to vector<128x16xf32>
    %24 = arith.mulf %17, %23 : vector<128x16xf32>
    %cst_11 = arith.constant dense<0.000000e+00> : vector<16xf32>
    %25 = vector.multi_reduction <add>, %24, %cst_11 [0] : vector<128x16xf32> to vector<16xf32>
    %26 = vector.shape_cast %25 : vector<16xf32> to vector<1x16xf32>
    %27 = arith.addf %22, %26 : vector<1x16xf32>
    %c0_12 = arith.constant 0 : index
    %c0_13 = arith.constant 0 : index
    %28 = vector.load %arg11[%c0_12, %c0_13] : memref<1x16xf32, #tpu.memory_space<vmem>>, vector<1x16xf32>
    tpu.vector_store %arg11[%c0_12, %c0_13], %27 {strides = array<i32>} : memref<1x16xf32, #tpu.memory_space<vmem>>, vector<1x16xf32>,
    %c2_i32 = arith.constant 2 : i32
    %29 = arith.cmpi eq, %arg0, %c2_i32 : i32
    %30 = arith.extui %29 : i1 to i32
    %c0_i32_14 = arith.constant 0 : i32
    %31 = arith.cmpi ne, %30, %c0_i32_14 : i32
    scf.if %31 {
      %c0_15 = arith.constant 0 : index
      %c0_16 = arith.constant 0 : index
      %32 = vector.load %arg11[%c0_15, %c0_16] : memref<1x16xf32, #tpu.memory_space<vmem>>, vector<1x16xf32>
      %c0_17 = arith.constant 0 : index
      %c0_18 = arith.constant 0 : index
      %33 = vector.load %arg7[%c0_17, %c0_18] : memref<16x8xf32, #tpu.memory_space<vmem>>, vector<16x8xf32>
      %cst_19 = arith.constant dense<0.000000e+00> : vector<1x8xf32>
      %34 = tpu.matmul %32, %33, %cst_19 {dimension_numbers = #tpu.dot_dimension_numbers<[1], [0], [0], [1], [0, 0, 1, 1], [], []>} : vector<1x16xf32>, vector<16x8xf32>, vector<1x8xf32> -> vector<1x8xf32>
      %c0_20 = arith.constant 0 : index
      %c0_21 = arith.constant 0 : index
      %35 = vector.load %arg8[%c0_20, %c0_21] : memref<1x8xf32, #tpu.memory_space<vmem>>, vector<1x8xf32>
      %36 = arith.addf %34, %35 : vector<1x8xf32>
      %c0_22 = arith.constant 0 : index
      %c0_23 = arith.constant 0 : index
      %37 = vector.load %arg9[%c0_22, %c0_23] : memref<1x8xf32, #tpu.memory_space<vmem>>, vector<1x8xf32>
      tpu.vector_store %arg9[%c0_22, %c0_23], %36 {strides = array<i32>} : memref<1x8xf32, #tpu.memory_space<vmem>>, vector<1x8xf32>,
    } else {
    }
    return
  }
  func.func @transform_0(%arg0: i32) -> (i32, i32) {
    %c0_i32 = arith.constant 0 : i32
    %c0_i32_0 = arith.constant 0 : i32
    return %arg0, %c0_i32 : i32, i32
  }
  func.func @transform_1(%arg0: i32) -> (i32, i32) {
    %c0_i32 = arith.constant 0 : i32
    %c0_i32_0 = arith.constant 0 : i32
    %c0_i32_1 = arith.constant 0 : i32
    return %c0_i32, %c0_i32_0 : i32, i32
  }
  func.func @transform_2(%arg0: i32) -> (i32, i32) {
    %c0_i32 = arith.constant 0 : i32
    %c0_i32_0 = arith.constant 0 : i32
    %c0_i32_1 = arith.constant 0 : i32
    return %c0_i32, %c0_i32_0 : i32, i32
  }
  func.func @transform_3(%arg0: i32) -> (i32, i32) {
    %c0_i32 = arith.constant 0 : i32
    %c0_i32_0 = arith.constant 0 : i32
    %c0_i32_1 = arith.constant 0 : i32
    return %c0_i32, %c0_i32_0 : i32, i32
  }
  func.func @transform_4(%arg0: i32) -> (i32, i32) {
    %c0_i32 = arith.constant 0 : i32
    %c0_i32_0 = arith.constant 0 : i32
    %c0_i32_1 = arith.constant 0 : i32
    return %c0_i32, %c0_i32_0 : i32, i32
  }
  func.func @transform_5(%arg0: i32) -> (i32, i32) {
    %c0_i32 = arith.constant 0 : i32
    %c0_i32_0 = arith.constant 0 : i32
    %c0_i32_1 = arith.constant 0 : i32
    return %c0_i32, %c0_i32_0 : i32, i32
  }
  func.func @transform_6(%arg0: i32) -> (i32, i32) {
    %c0_i32 = arith.constant 0 : i32
    %c0_i32_0 = arith.constant 0 : i32
    %c0_i32_1 = arith.constant 0 : i32
    return %c0_i32, %c0_i32_0 : i32, i32
  }
  func.func @transform_7(%arg0: i32) -> (i32, i32) {
    %c0_i32 = arith.constant 0 : i32
    %c0_i32_0 = arith.constant 0 : i32
    %c0_i32_1 = arith.constant 0 : i32
    return %c0_i32, %c0_i32_0 : i32, i32
  }
  func.func @transform_8(%arg0: i32) -> (i32, i32) {
    %c0_i32 = arith.constant 0 : i32
    %c0_i32_0 = arith.constant 0 : i32
    %c0_i32_1 = arith.constant 0 : i32
    return %c0_i32, %c0_i32_0 : i32, i32
  }
}

</mosaic_0001>

<llo_original>
// kernel: tpu_custom_call.1
$region0: #{tpu_custom_call.1}
  #allocation0 [shape = 'u32[]', space=smem, size = 0x4, offset = 0x4, fixed_abs, tag = 'smem constant byte address 0x4 - core index']
  #allocation1 [shape = 'u32[144,128]{1,0:T(1,128)}', space=vmem, size = 0x12000, scoped, tag = 'internal scratch']
  #allocation2 [shape = 'bf16[384,17]{1,0:T(8,128)(2,1)}', space=vmem, size = 0x18000, scoped, tag = 'scratch operand']
  #allocation3 [shape = 'f32[1,16]{1,0:T(1,128)}', space=vmem, size = 0x200, scoped, tag = 'scratch operand']
  %s0 = inlined_call_operand.vmem [shape: bf16[384,384], index: 0, kind: input, shape index: {}]
  %s1 = inlined_call_operand.vmem [shape: f32[384,1], index: 1, kind: input, shape index: {}]
  %s2 = inlined_call_operand.vmem [shape: f32[1,384], index: 2, kind: input, shape index: {}]
  %s3 = inlined_call_operand.vmem [shape: f32[384,32], index: 3, kind: input, shape index: {}]
  %s4 = inlined_call_operand.vmem [shape: f32[32,16], index: 4, kind: input, shape index: {}]
  %s5 = inlined_call_operand.vmem [shape: f32[1,16], index: 5, kind: input, shape index: {}]
  %s6 = inlined_call_operand.vmem [shape: f32[16,8], index: 6, kind: input, shape index: {}]
  %s7 = inlined_call_operand.vmem [shape: f32[1,8], index: 7, kind: input, shape index: {}]
  %s8 = inlined_call_operand.hbm [shape: f32[1,8], index: 8, kind: output, shape index: {}]
  %s9 = sld [smem:[#allocation0]]
  $region73: #{tpu_custom_call.1} parent=0
    _
  %s11 = ssub.s32 1, %s9
  %s12 = scalar_select 0, %s11, %s9
  $region1: #{tpu_custom_call.1} parent=0
    #allocation4 [shape = 'u8[512]{0}', space=vmem, size = 0x400, scoped, tag = 'output window, operand 0, single buffered']
    #allocation5 [shape = 's32[2]{0}', space=sflag, size = 0x8, scoped, tag = 'scoped memory for tpu_custom_call.1']
    %13 = vsyncpa [#allocation5], 0
    loop: start=0, step=1, limit=5
    $region2: #{tpu_custom_call.1} parent=1 // loop_pre_header
      _
    $region3: #{tpu_custom_call.1} parent=1 // loop_header
      %s15 = sphi 0, %s19
      %p16 = scmp.ge.s32.totalorder %s15, 5
      %s25 = sphi 0, %s27
      %s28 = sphi 0, %s25
      %s29 = sphi 0, %s28
      %s45 = sphi 0, %s29
      %s49 = sphi 0, %s49
      %s51 = sphi 0, %s49
      %s52 = sphi 0, %s51
      %s66 = sphi 0, %s52
      %s70 = sphi 0, %s70
      %s72 = sphi 0, %s70
      %s73 = sphi 0, %s72
      %s87 = sphi 0, %s73
      %s91 = sphi 0, %s91
      %s93 = sphi 0, %s91
      %s94 = sphi 0, %s93
      %s108 = sphi 0, %s94
      %s112 = sphi 0, %s112
      %s114 = sphi 0, %s112
      %s115 = sphi 0, %s114
      %s129 = sphi 0, %s115
      %s133 = sphi 0, %s133
      %s135 = sphi 0, %s133
      %s136 = sphi 0, %s135
      %s150 = sphi 0, %s136
      %s154 = sphi 0, %s154
      %s156 = sphi 0, %s154
      %s157 = sphi 0, %s156
      %s171 = sphi 0, %s157
      %s175 = sphi 0, %s175
      %s177 = sphi 0, %s175
      %s178 = sphi 0, %s177
      %s192 = sphi 0, %s178
      %s196 = sphi 0, %s196
      %s198 = sphi 0, %s196
      %s199 = sphi 0, %s198
      %s213 = sphi 0, %s199
    $region4: #{tpu_custom_call.1} parent=1 // loop_header_branch
      %18 = sbr.rel (%p16) target = $region8
    $region5: #{tpu_custom_call.1} parent=1 // loop_body
      %s20 = ssub.s32 %s15, 1
      %s21 = ssub.s32 %s15, 2
      %s22 = sadd.s32 %s15, 1
      %s23 = ssub.s32 %s15, %s22
      %p24 = scmp.eq.s32.totalorder %s23, 0
      %s26 = sadd.s32 %s25, 1
      %s27 = scalar_select %p24, %s25, %s26
      %p30 = pneg %p24
      %p31 = scmp.eq.s32.totalorder %s15, 2
      %p32 = por %p30, %p31
      %p33 = scmp.ne.s32.totalorder %s25, %s28
      %p34 = scmp.eq.s32.totalorder %s15, 0
      %p35 = por %p33, %p34
      %p36 = scmp.ne.s32.totalorder %s25, %s28
      %p37 = scmp.eq.s32.totalorder %s20, 2
      %p38 = por %p36, %p37
      %p39 = scmp.ne.s32.totalorder %s28, %s29
      %p40 = scmp.eq.s32.totalorder %s20, 0
      %p41 = por %p39, %p40
      %p42 = scmp.ne.s32.totalorder %s28, %s29
      %p43 = scmp.eq.s32.totalorder %s21, 2
      %p44 = por %p42, %p43
      %p46 = scmp.ne.s32.totalorder %s29, %s45
      %p47 = scmp.eq.s32.totalorder %s21, 0
      %p48 = por %p46, %p47
      %s50 = sadd.s32 %s49, 1
      %p53 = scmp.eq.s32.totalorder %s15, 2
      %p54 = scmp.ne.s32.totalorder %s49, %s51
      %p55 = scmp.eq.s32.totalorder %s15, 0
      %p56 = por %p54, %p55
      %p57 = scmp.ne.s32.totalorder %s49, %s51
      %p58 = scmp.eq.s32.totalorder %s20, 2
      %p59 = por %p57, %p58
      %p60 = scmp.ne.s32.totalorder %s51, %s52
      %p61 = scmp.eq.s32.totalorder %s20, 0
      %p62 = por %p60, %p61
      %p63 = scmp.ne.s32.totalorder %s51, %s52
      %p64 = scmp.eq.s32.totalorder %s21, 2
      %p65 = por %p63, %p64
      %p67 = scmp.ne.s32.totalorder %s52, %s66
      %p68 = scmp.eq.s32.totalorder %s21, 0
      %p69 = por %p67, %p68
      %s71 = sadd.s32 %s70, 1
      %p74 = scmp.eq.s32.totalorder %s15, 2
      %p75 = scmp.ne.s32.totalorder %s70, %s72
      %p76 = scmp.eq.s32.totalorder %s15, 0
      %p77 = por %p75, %p76
      %p78 = scmp.ne.s32.totalorder %s70, %s72
      %p79 = scmp.eq.s32.totalorder %s20, 2
      %p80 = por %p78, %p79
      %p81 = scmp.ne.s32.totalorder %s72, %s73
      %p82 = scmp.eq.s32.totalorder %s20, 0
      %p83 = por %p81, %p82
      %p84 = scmp.ne.s32.totalorder %s72, %s73
      %p85 = scmp.eq.s32.totalorder %s21, 2
      %p86 = por %p84, %p85
      %p88 = scmp.ne.s32.totalorder %s73, %s87
      %p89 = scmp.eq.s32.totalorder %s21, 0
      %p90 = por %p88, %p89
      %s92 = sadd.s32 %s91, 1
      %p95 = scmp.eq.s32.totalorder %s15, 2
      %p96 = scmp.ne.s32.totalorder %s91, %s93
      %p97 = scmp.eq.s32.totalorder %s15, 0
      %p98 = por %p96, %p97
      %p99 = scmp.ne.s32.totalorder %s91, %s93
      %p100 = scmp.eq.s32.totalorder %s20, 2
      %p101 = por %p99, %p100
      %p102 = scmp.ne.s32.totalorder %s93, %s94
      %p103 = scmp.eq.s32.totalorder %s20, 0
      %p104 = por %p102, %p103
      %p105 = scmp.ne.s32.totalorder %s93, %s94
      %p106 = scmp.eq.s32.totalorder %s21, 2
      %p107 = por %p105, %p106
      %p109 = scmp.ne.s32.totalorder %s94, %s108
      %p110 = scmp.eq.s32.totalorder %s21, 0
      %p111 = por %p109, %p110
      %s113 = sadd.s32 %s112, 1
      %p116 = scmp.eq.s32.totalorder %s15, 2
      %p117 = scmp.ne.s32.totalorder %s112, %s114
      %p118 = scmp.eq.s32.totalorder %s15, 0
      %p119 = por %p117, %p118
      %p120 = scmp.ne.s32.totalorder %s112, %s114
      %p121 = scmp.eq.s32.totalorder %s20, 2
      %p122 = por %p120, %p121
      %p123 = scmp.ne.s32.totalorder %s114, %s115
      %p124 = scmp.eq.s32.totalorder %s20, 0
      %p125 = por %p123, %p124
      %p126 = scmp.ne.s32.totalorder %s114, %s115
      %p127 = scmp.eq.s32.totalorder %s21, 2
      %p128 = por %p126, %p127
      %p130 = scmp.ne.s32.totalorder %s115, %s129
      %p131 = scmp.eq.s32.totalorder %s21, 0
      %p132 = por %p130, %p131
      %s134 = sadd.s32 %s133, 1
      %p137 = scmp.eq.s32.totalorder %s15, 2
      %p138 = scmp.ne.s32.totalorder %s133, %s135
      %p139 = scmp.eq.s32.totalorder %s15, 0
      %p140 = por %p138, %p139
      %p141 = scmp.ne.s32.totalorder %s133, %s135
      %p142 = scmp.eq.s32.totalorder %s20, 2
      %p143 = por %p141, %p142
      %p144 = scmp.ne.s32.totalorder %s135, %s136
      %p145 = scmp.eq.s32.totalorder %s20, 0
      %p146 = por %p144, %p145
      %p147 = scmp.ne.s32.totalorder %s135, %s136
      %p148 = scmp.eq.s32.totalorder %s21, 2
      %p149 = por %p147, %p148
      %p151 = scmp.ne.s32.totalorder %s136, %s150
      %p152 = scmp.eq.s32.totalorder %s21, 0
      %p153 = por %p151, %p152
      %s155 = sadd.s32 %s154, 1
      %p158 = scmp.eq.s32.totalorder %s15, 2
      %p159 = scmp.ne.s32.totalorder %s154, %s156
      %p160 = scmp.eq.s32.totalorder %s15, 0
      %p161 = por %p159, %p160
      %p162 = scmp.ne.s32.totalorder %s154, %s156
      %p163 = scmp.eq.s32.totalorder %s20, 2
      %p164 = por %p162, %p163
      %p165 = scmp.ne.s32.totalorder %s156, %s157
      %p166 = scmp.eq.s32.totalorder %s20, 0
      %p167 = por %p165, %p166
      %p168 = scmp.ne.s32.totalorder %s156, %s157
      %p169 = scmp.eq.s32.totalorder %s21, 2
      %p170 = por %p168, %p169
      %p172 = scmp.ne.s32.totalorder %s157, %s171
      %p173 = scmp.eq.s32.totalorder %s21, 0
      %p174 = por %p172, %p173
      %s176 = sadd.s32 %s175, 1
      %p179 = scmp.eq.s32.totalorder %s15, 2
      %p180 = scmp.ne.s32.totalorder %s175, %s177
      %p181 = scmp.eq.s32.totalorder %s15, 0
      %p182 = por %p180, %p181
      %p183 = scmp.ne.s32.totalorder %s175, %s177
      %p184 = scmp.eq.s32.totalorder %s20, 2
      %p185 = por %p183, %p184
      %p186 = scmp.ne.s32.totalorder %s177, %s178
      %p187 = scmp.eq.s32.totalorder %s20, 0
      %p188 = por %p186, %p187
      %p189 = scmp.ne.s32.totalorder %s177, %s178
      %p190 = scmp.eq.s32.totalorder %s21, 2
      %p191 = por %p189, %p190
      %p193 = scmp.ne.s32.totalorder %s178, %s192
      %p194 = scmp.eq.s32.totalorder %s21, 0
      %p195 = por %p193, %p194
      %s197 = sadd.s32 %s196, 1
      %p200 = scmp.eq.s32.totalorder %s15, 2
      %p201 = scmp.ne.s32.totalorder %s196, %s198
      %p202 = scmp.eq.s32.totalorder %s15, 0
      %p203 = por %p201, %p202
      %p204 = scmp.ne.s32.totalorder %s196, %s198
      %p205 = scmp.eq.s32.totalorder %s20, 2
      %p206 = por %p204, %p205
      %p207 = scmp.ne.s32.totalorder %s198, %s199
      %p208 = scmp.eq.s32.totalorder %s20, 0
      %p209 = por %p207, %p208
      %p210 = scmp.ne.s32.totalorder %s198, %s199
      %p211 = scmp.eq.s32.totalorder %s21, 2
      %p212 = por %p210, %p211
      %p214 = scmp.ne.s32.totalorder %s199, %s213
      %p215 = scmp.eq.s32.totalorder %s21, 0
      %p216 = por %p214, %p215
      %p217 = scmp.le.s32.totalorder 1, %s15
      %p218 = scmp.lt.s32.totalorder %s15, 4
      %p219 = pnand %p217, %p218
      %p220 = pneg %p219
      // Predicated region
      $region9: #{tpu_custom_call.1} parent=5 // pred_check
        _
      $region10: #{tpu_custom_call.1} parent=5 // pred_check_branch
        %222 = sbr.rel (%p219) target = $region12
      $region11: #{tpu_custom_call.1} parent=5 // pred_region
        %s223 = ssub.s32 %s15, 1
        // Predicated region
        $region13: #{tpu_custom_call.1} parent=11 // pred_check
          %p224 = pneg %p62
        $region14: #{tpu_custom_call.1} parent=11 // pred_check_branch
          %226 = sbr.rel (%p224) target = $region16
        $region15: #{tpu_custom_call.1} parent=11 // pred_region
          _
        $region16: #{tpu_custom_call.1} parent=11 // pred_fallthru
          _
        // Predicated region
        $region17: #{tpu_custom_call.1} parent=11 // pred_check
          %p227 = pneg %p83
        $region18: #{tpu_custom_call.1} parent=11 // pred_check_branch
          %229 = sbr.rel (%p227) target = $region20
        $region19: #{tpu_custom_call.1} parent=11 // pred_region
          _
        $region20: #{tpu_custom_call.1} parent=11 // pred_fallthru
          _
        // Predicated region
        $region21: #{tpu_custom_call.1} parent=11 // pred_check
          %p230 = pneg %p104
        $region22: #{tpu_custom_call.1} parent=11 // pred_check_branch
          %232 = sbr.rel (%p230) target = $region24
        $region23: #{tpu_custom_call.1} parent=11 // pred_region
          _
        $region24: #{tpu_custom_call.1} parent=11 // pred_fallthru
          _
        // Predicated region
        $region25: #{tpu_custom_call.1} parent=11 // pred_check
          %p233 = pneg %p125
        $region26: #{tpu_custom_call.1} parent=11 // pred_check_branch
          %235 = sbr.rel (%p233) target = $region28
        $region27: #{tpu_custom_call.1} parent=11 // pred_region
          _
        $region28: #{tpu_custom_call.1} parent=11 // pred_fallthru
          _
        // Predicated region
        $region29: #{tpu_custom_call.1} parent=11 // pred_check
          %p236 = pneg %p146
        $region30: #{tpu_custom_call.1} parent=11 // pred_check_branch
          %238 = sbr.rel (%p236) target = $region32
        $region31: #{tpu_custom_call.1} parent=11 // pred_region
          _
        $region32: #{tpu_custom_call.1} parent=11 // pred_fallthru
          _
        // Predicated region
        $region33: #{tpu_custom_call.1} parent=11 // pred_check
          %p239 = pneg %p167
        $region34: #{tpu_custom_call.1} parent=11 // pred_check_branch
          %241 = sbr.rel (%p239) target = $region36
        $region35: #{tpu_custom_call.1} parent=11 // pred_region
          _
        $region36: #{tpu_custom_call.1} parent=11 // pred_fallthru
          _
        // Predicated region
        $region37: #{tpu_custom_call.1} parent=11 // pred_check
          %p242 = pneg %p188
        $region38: #{tpu_custom_call.1} parent=11 // pred_check_branch
          %244 = sbr.rel (%p242) target = $region40
        $region39: #{tpu_custom_call.1} parent=11 // pred_region
          _
        $region40: #{tpu_custom_call.1} parent=11 // pred_fallthru
          _
      $region12: #{tpu_custom_call.1} parent=5 // pred_fallthru
        _
      %p245 = scmp.lt.s32.totalorder %s15, 3
      // Predicated region
      $region41: #{tpu_custom_call.1} parent=5 // pred_check
        %p246 = pneg %p245
      $region42: #{tpu_custom_call.1} parent=5 // pred_check_branch
        %248 = sbr.rel (%p246) target = $region44
      $region43: #{tpu_custom_call.1} parent=5 // pred_region
        // Predicated region
        $region45: #{tpu_custom_call.1} parent=43 // pred_check
          %p249 = pneg %p35
        $region46: #{tpu_custom_call.1} parent=43 // pred_check_branch
          %251 = sbr.rel (%p249) target = $region48
        $region47: #{tpu_custom_call.1} parent=43 // pred_region
          %s252 = smul.u32 16, %s15
          %p253 = scmp.lt.s32.totalorder %s252, 47
          %s254 = scalar_select %p253, %s252, 47
          %s255 = smul.addr %s254, 3
          %s256 = smul.addr %s255, 4
          %s257 = scalar_lea.vmem %s0, %s256
          %s258 = smul.u32 16, %s15
        $region48: #{tpu_custom_call.1} parent=43 // pred_fallthru
          _
      $region44: #{tpu_custom_call.1} parent=5 // pred_fallthru
        _
      %p259 = scmp.le.s32.totalorder 1, %s15
      %p260 = scmp.lt.s32.totalorder %s15, 4
      %p261 = pnand %p259, %p260
      %p262 = pneg %p261
      // Predicated region
      $region49: #{tpu_custom_call.1} parent=5 // pred_check
        _
      $region50: #{tpu_custom_call.1} parent=5 // pred_check_branch
        %264 = sbr.rel (%p261) target = $region52
      $region51: #{tpu_custom_call.1} parent=5 // pred_region
        %s265 = ssub.s32 %s15, 1
        %s266 = smul.u32 16, %s20
        %p267 = scmp.lt.s32.totalorder %s266, 47
        %s268 = scalar_select %p267, %s266, 47
        %s269 = smul.addr %s268, 3
        %s270 = smul.addr %s269, 4
        %s271 = scalar_lea.vmem %s0, %s270
        %p272 = pneg %p41
        %p273 = pneg %p38
        %p274 = pneg %p62
        %p275 = pneg %p59
        %p276 = pneg %p83
        %p277 = pneg %p80
        %p278 = pneg %p104
        %p279 = pneg %p101
        %p280 = pneg %p125
        %p281 = pneg %p122
        %p282 = pneg %p146
        %p283 = pneg %p143
        %p284 = pneg %p167
        %p285 = pneg %p164
        %p286 = pneg %p188
        %p287 = pneg %p185
        %p288 = pneg %p209
        %p289 = pneg %p206
        %s290 = smul.u32 16, %s20
        %p291 = scmp.lt.s32.totalorder %s290, 47
        %s292 = scalar_select %p291, %s290, 47
        %s293 = smul.addr %s292, 3
        %s294 = smul.addr %s293, 4
        %s295 = scalar_lea.vmem %s0, %s294
        %s296 = smul.u32 16, %s20
        %p298 = scmp.eq.s32.totalorder %s20, 0
        // Predicated region
        $region53: #{tpu_custom_call.1} parent=51 // pred_check
          %p299 = pneg %p298
        $region54: #{tpu_custom_call.1} parent=51 // pred_check_branch
          %301 = sbr.rel (%p299) target = $region56
        $region55: #{tpu_custom_call.1} parent=51 // pred_region
          %v302 = vld [vmem:[%s3] sm:$0xff]
          %v303 = vld [vmem:[%s3 + $0x8] sm:$0xff]
          %v304 = vld [vmem:[%s3 + $0x10] sm:$0xff]
          %v305 = vld [vmem:[%s3 + $0x18] sm:$0xff]
          %v306 = vld [vmem:[%s3 + $0x20] sm:$0xff]
          %v307 = vld [vmem:[%s3 + $0x28] sm:$0xff]
          %v308 = vld [vmem:[%s3 + $0x30] sm:$0xff]
          %v309 = vld [vmem:[%s3 + $0x38] sm:$0xff]
          %v310 = vld [vmem:[%s3 + $0x40] sm:$0xff]
          %v311 = vld [vmem:[%s3 + $0x48] sm:$0xff]
          %v312 = vld [vmem:[%s3 + $0x50] sm:$0xff]
          %v313 = vld [vmem:[%s3 + $0x58] sm:$0xff]
          %v314 = vld [vmem:[%s3 + $0x60] sm:$0xff]
          %v315 = vld [vmem:[%s3 + $0x68] sm:$0xff]
          %v316 = vld [vmem:[%s3 + $0x70] sm:$0xff]
          %v317 = vld [vmem:[%s3 + $0x78] sm:$0xff]
          %v318 = vld [vmem:[%s3 + $0x80] sm:$0xff]
          %v319 = vld [vmem:[%s3 + $0x88] sm:$0xff]
          %v320 = vld [vmem:[%s3 + $0x90] sm:$0xff]
          %v321 = vld [vmem:[%s3 + $0x98] sm:$0xff]
          %v322 = vld [vmem:[%s3 + $0xa0] sm:$0xff]
          %v323 = vld [vmem:[%s3 + $0xa8] sm:$0xff]
          %v324 = vld [vmem:[%s3 + $0xb0] sm:$0xff]
          %v325 = vld [vmem:[%s3 + $0xb8] sm:$0xff]
          %v326 = vld [vmem:[%s3 + $0xc0] sm:$0xff]
          %v327 = vld [vmem:[%s3 + $0xc8] sm:$0xff]
          %v328 = vld [vmem:[%s3 + $0xd0] sm:$0xff]
          %v329 = vld [vmem:[%s3 + $0xd8] sm:$0xff]
          %v330 = vld [vmem:[%s3 + $0xe0] sm:$0xff]
          %v331 = vld [vmem:[%s3 + $0xe8] sm:$0xff]
          %v332 = vld [vmem:[%s3 + $0xf0] sm:$0xff]
          %v333 = vld [vmem:[%s3 + $0xf8] sm:$0xff]
          %v334 = vld [vmem:[%s3 + $0x100] sm:$0xff]
          %v335 = vld [vmem:[%s3 + $0x108] sm:$0xff]
          %v336 = vld [vmem:[%s3 + $0x110] sm:$0xff]
          %v337 = vld [vmem:[%s3 + $0x118] sm:$0xff]
          %v338 = vld [vmem:[%s3 + $0x120] sm:$0xff]
          %v339 = vld [vmem:[%s3 + $0x128] sm:$0xff]
          %v340 = vld [vmem:[%s3 + $0x130] sm:$0xff]
          %v341 = vld [vmem:[%s3 + $0x138] sm:$0xff]
          %v342 = vld [vmem:[%s3 + $0x140] sm:$0xff]
          %v343 = vld [vmem:[%s3 + $0x148] sm:$0xff]
          %v344 = vld [vmem:[%s3 + $0x150] sm:$0xff]
          %v345 = vld [vmem:[%s3 + $0x158] sm:$0xff]
          %v346 = vld [vmem:[%s3 + $0x160] sm:$0xff]
          %v347 = vld [vmem:[%s3 + $0x168] sm:$0xff]
          %v348 = vld [vmem:[%s3 + $0x170] sm:$0xff]
          %v349 = vld [vmem:[%s3 + $0x178] sm:$0xff]
          %v350 = vld [vmem:[%s4] sm:$0xff]
          %v351 = vld [vmem:[%s4 + $0x8] sm:$0xff]
          %v352 = vld [vmem:[%s4 + $0x10] sm:$0xff]
          %v353 = vld [vmem:[%s4 + $0x18] sm:$0xff]
          %vm354 = vcmask 261120
          %v356 = vsel %vm354, %v302, 0
          %v359 = vsel %vm354, %v303, 0
          %v362 = vsel %vm354, %v304, 0
          %v365 = vsel %vm354, %v305, 0
          %v368 = vsel %vm354, %v306, 0
          %v371 = vsel %vm354, %v307, 0
          %v374 = vsel %vm354, %v308, 0
          %v377 = vsel %vm354, %v309, 0
          %v380 = vsel %vm354, %v310, 0
          %v383 = vsel %vm354, %v311, 0
          %v386 = vsel %vm354, %v312, 0
          %v389 = vsel %vm354, %v313, 0
          %v392 = vsel %vm354, %v314, 0
          %v395 = vsel %vm354, %v315, 0
          %v398 = vsel %vm354, %v316, 0
          %v401 = vsel %vm354, %v317, 0
          %v404 = vsel %vm354, %v318, 0
          %v407 = vsel %vm354, %v319, 0
          %v410 = vsel %vm354, %v320, 0
          %v413 = vsel %vm354, %v321, 0
          %v416 = vsel %vm354, %v322, 0
          %v419 = vsel %vm354, %v323, 0
          %v422 = vsel %vm354, %v324, 0
          %v425 = vsel %vm354, %v325, 0
          %v428 = vsel %vm354, %v326, 0
          %v431 = vsel %vm354, %v327, 0
          %v434 = vsel %vm354, %v328, 0
          %v437 = vsel %vm354, %v329, 0
          %v440 = vsel %vm354, %v330, 0
          %v443 = vsel %vm354, %v331, 0
          %v446 = vsel %vm354, %v332, 0
          %v449 = vsel %vm354, %v333, 0
          %v452 = vsel %vm354, %v334, 0
          %v455 = vsel %vm354, %v335, 0
          %v458 = vsel %vm354, %v336, 0
          %v461 = vsel %vm354, %v337, 0
          %v464 = vsel %vm354, %v338, 0
          %v467 = vsel %vm354, %v339, 0
          %v470 = vsel %vm354, %v340, 0
          %v473 = vsel %vm354, %v341, 0
          %v476 = vsel %vm354, %v342, 0
          %v479 = vsel %vm354, %v343, 0
          %v482 = vsel %vm354, %v344, 0
          %v485 = vsel %vm354, %v345, 0
          %v488 = vsel %vm354, %v346, 0
          %v491 = vsel %vm354, %v347, 0
          %v494 = vsel %vm354, %v348, 0
          %v497 = vsel %vm354, %v349, 0
          %499 = vmatprep.subr.mxu0 0.0
          %500 = vmatpush1.msra.mxu0 0.0
          %501 = vmatprep.subr.mxu0 0.0
          %502 = vmatpush1.msra.mxu0 0.0
          %503 = vmatprep.subr.mxu0 0.0
          %504 = vmatpush1.msra.mxu0 0.0
          %505 = vmatprep.subr.mxu0 0.0
          %506 = vmatpush1.msra.mxu0 0.0
          %507 = vmatprep.subr.mxu0 0.0
          %508 = vmatpush1.msra.mxu0 0.0
          %509 = vmatprep.subr.mxu0 0.0
          %510 = vmatpush1.msra.mxu0 0.0
          %511 = vmatprep.subr.mxu0 0.0
          %512 = vmatpush1.msra.mxu0 0.0
          %513 = vmatprep.subr.mxu0 0.0
          %514 = vmatpush1.msra.mxu0 0.0
          %515 = vmatprep.subr.mxu0 0.0
          %516 = vmatpush1.msra.mxu0 0.0
          %517 = vmatprep.subr.mxu0 0.0
          %518 = vmatpush1.msra.mxu0 0.0
          %519 = vmatprep.subr.mxu0 0.0
          %520 = vmatpush1.msra.mxu0 0.0
          %521 = vmatprep.subr.mxu0 0.0
          %522 = vmatpush1.msra.mxu0 0.0
          %523 = vmatprep.subr.mxu0 0.0
          %524 = vmatpush1.msra.mxu0 %v353
          %525 = vmatprep.subr.mxu0 0.0
          %526 = vmatpush1.msra.mxu0 %v352
          %527 = vmatprep.subr.mxu0 0.0
          %528 = vmatpush1.msra.mxu0 %v351
          %529 = vmatprep.subr.mxu0 0.0
          %530 = vmatpush1.msra.mxu0 %v350
          %531 = vmatprep.subr.mxu0 0.0
          %532 = vmatpush2.msra.mxu0 0.0
          %533 = vmatprep.subr.mxu0 0.0
          %534 = vmatpush2.msra.mxu0 0.0
          %535 = vmatprep.subr.mxu0 0.0
          %536 = vmatpush2.msra.mxu0 0.0
          %537 = vmatprep.subr.mxu0 0.0
          %538 = vmatpush2.msra.mxu0 0.0
          %539 = vmatprep.subr.mxu0 0.0
          %540 = vmatpush2.msra.mxu0 0.0
          %541 = vmatprep.subr.mxu0 0.0
          %542 = vmatpush2.msra.mxu0 0.0
          %543 = vmatprep.subr.mxu0 0.0
          %544 = vmatpush2.msra.mxu0 0.0
          %545 = vmatprep.subr.mxu0 0.0
          %546 = vmatpush2.msra.mxu0 0.0
          %547 = vmatprep.subr.mxu0 0.0
          %548 = vmatpush2.msra.mxu0 0.0
          %549 = vmatprep.subr.mxu0 0.0
          %550 = vmatpush2.msra.mxu0 0.0
          %551 = vmatprep.subr.mxu0 0.0
          %552 = vmatpush2.msra.mxu0 0.0
          %553 = vmatprep.subr.mxu0 0.0
          %554 = vmatpush2.msra.mxu0 0.0
          %555 = vmatprep.subr.mxu0 0.0
          %556 = vmatpush2.msra.mxu0 0.0
          %557 = vmatprep.subr.mxu0 0.0
          %558 = vmatpush2.msra.mxu0 0.0
          %559 = vmatprep.subr.mxu0 0.0
          %560 = vmatpush2.msra.mxu0 0.0
          %561 = vmatprep.subr.mxu0 0.0
          %562 = vmatpush2.msra.mxu0 0.0
          %563 = vmatprep.mubr.f32.mxu0 0.0
          %564 = vmatmul.mubr.f32.gmra.mxu0 %v356
          %v565 = vpop.f32.mrf.mxu0
          %v566 = vadd.f32 0.0, %v565
          %v567 = vpop.f32.mrf.mxu0
          %568 = vmatprep.mubr.f32.mxu0 0.0
          %569 = vmatmul.mubr.f32.gmra.mxu0 %v359
          %v570 = vpop.f32.mrf.mxu0
          %v571 = vadd.f32 0.0, %v570
          %v572 = vpop.f32.mrf.mxu0
          %573 = vmatprep.mubr.f32.mxu0 0.0
          %574 = vmatmul.mubr.f32.gmra.mxu0 %v362
          %v575 = vpop.f32.mrf.mxu0
          %v576 = vadd.f32 0.0, %v575
          %v577 = vpop.f32.mrf.mxu0
          %578 = vmatprep.mubr.f32.mxu0 0.0
          %579 = vmatmul.mubr.f32.gmra.mxu0 %v365
          %v580 = vpop.f32.mrf.mxu0
          %v581 = vadd.f32 0.0, %v580
          %v582 = vpop.f32.mrf.mxu0
          %583 = vmatprep.mubr.f32.mxu0 0.0
          %584 = vmatmul.mubr.f32.gmra.mxu0 %v368
          %v585 = vpop.f32.mrf.mxu0
          %v586 = vadd.f32 0.0, %v585
          %v587 = vpop.f32.mrf.mxu0
          %588 = vmatprep.mubr.f32.mxu0 0.0
          %589 = vmatmul.mubr.f32.gmra.mxu0 %v371
          %v590 = vpop.f32.mrf.mxu0
          %v591 = vadd.f32 0.0, %v590
          %v592 = vpop.f32.mrf.mxu0
          %593 = vmatprep.mubr.f32.mxu0 0.0
          %594 = vmatmul.mubr.f32.gmra.mxu0 %v374
          %v595 = vpop.f32.mrf.mxu0
          %v596 = vadd.f32 0.0, %v595
          %v597 = vpop.f32.mrf.mxu0
          %598 = vmatprep.mubr.f32.mxu0 0.0
          %599 = vmatmul.mubr.f32.gmra.mxu0 %v377
          %v600 = vpop.f32.mrf.mxu0
          %v601 = vadd.f32 0.0, %v600
          %v602 = vpop.f32.mrf.mxu0
          %603 = vmatprep.mubr.f32.mxu0 0.0
          %604 = vmatmul.mubr.f32.gmra.mxu0 %v380
          %v605 = vpop.f32.mrf.mxu0
          %v606 = vadd.f32 0.0, %v605
          %v607 = vpop.f32.mrf.mxu0
          %608 = vmatprep.mubr.f32.mxu0 0.0
          %609 = vmatmul.mubr.f32.gmra.mxu0 %v383
          %v610 = vpop.f32.mrf.mxu0
          %v611 = vadd.f32 0.0, %v610
          %v612 = vpop.f32.mrf.mxu0
          %613 = vmatprep.mubr.f32.mxu0 0.0
          %614 = vmatmul.mubr.f32.gmra.mxu0 %v386
          %v615 = vpop.f32.mrf.mxu0
          %v616 = vadd.f32 0.0, %v615
          %v617 = vpop.f32.mrf.mxu0
          %618 = vmatprep.mubr.f32.mxu0 0.0
          %619 = vmatmul.mubr.f32.gmra.mxu0 %v389
          %v620 = vpop.f32.mrf.mxu0
          %v621 = vadd.f32 0.0, %v620
          %v622 = vpop.f32.mrf.mxu0
          %623 = vmatprep.mubr.f32.mxu0 0.0
          %624 = vmatmul.mubr.f32.gmra.mxu0 %v392
          %v625 = vpop.f32.mrf.mxu0
          %v626 = vadd.f32 0.0, %v625
          %v627 = vpop.f32.mrf.mxu0
          %628 = vmatprep.mubr.f32.mxu0 0.0
          %629 = vmatmul.mubr.f32.gmra.mxu0 %v395
          %v630 = vpop.f32.mrf.mxu0
          %v631 = vadd.f32 0.0, %v630
          %v632 = vpop.f32.mrf.mxu0
          %633 = vmatprep.mubr.f32.mxu0 0.0
          %634 = vmatmul.mubr.f32.gmra.mxu0 %v398
          %v635 = vpop.f32.mrf.mxu0
          %v636 = vadd.f32 0.0, %v635
          %v637 = vpop.f32.mrf.mxu0
          %638 = vmatprep.mubr.f32.mxu0 0.0
          %639 = vmatmul.mubr.f32.gmra.mxu0 %v401
          %v640 = vpop.f32.mrf.mxu0
          %v641 = vadd.f32 0.0, %v640
          %v642 = vpop.f32.mrf.mxu0
          %643 = vmatprep.mubr.f32.mxu0 0.0
          %644 = vmatmul.mubr.f32.gmra.mxu0 %v404
          %v645 = vpop.f32.mrf.mxu0
          %v646 = vadd.f32 0.0, %v645
          %v647 = vpop.f32.mrf.mxu0
          %648 = vmatprep.mubr.f32.mxu0 0.0
          %649 = vmatmul.mubr.f32.gmra.mxu0 %v407
          %v650 = vpop.f32.mrf.mxu0
          %v651 = vadd.f32 0.0, %v650
          %v652 = vpop.f32.mrf.mxu0
          %653 = vmatprep.mubr.f32.mxu0 0.0
          %654 = vmatmul.mubr.f32.gmra.mxu0 %v410
          %v655 = vpop.f32.mrf.mxu0
          %v656 = vadd.f32 0.0, %v655
          %v657 = vpop.f32.mrf.mxu0
          %658 = vmatprep.mubr.f32.mxu0 0.0
          %659 = vmatmul.mubr.f32.gmra.mxu0 %v413
          %v660 = vpop.f32.mrf.mxu0
          %v661 = vadd.f32 0.0, %v660
          %v662 = vpop.f32.mrf.mxu0
          %663 = vmatprep.mubr.f32.mxu0 0.0
          %664 = vmatmul.mubr.f32.gmra.mxu0 %v416
          %v665 = vpop.f32.mrf.mxu0
          %v666 = vadd.f32 0.0, %v665
          %v667 = vpop.f32.mrf.mxu0
          %668 = vmatprep.mubr.f32.mxu0 0.0
          %669 = vmatmul.mubr.f32.gmra.mxu0 %v419
          %v670 = vpop.f32.mrf.mxu0
          %v671 = vadd.f32 0.0, %v670
          %v672 = vpop.f32.mrf.mxu0
          %673 = vmatprep.mubr.f32.mxu0 0.0
          %674 = vmatmul.mubr.f32.gmra.mxu0 %v422
          %v675 = vpop.f32.mrf.mxu0
          %v676 = vadd.f32 0.0, %v675
          %v677 = vpop.f32.mrf.mxu0
          %678 = vmatprep.mubr.f32.mxu0 0.0
          %679 = vmatmul.mubr.f32.gmra.mxu0 %v425
          %v680 = vpop.f32.mrf.mxu0
          %v681 = vadd.f32 0.0, %v680
          %v682 = vpop.f32.mrf.mxu0
          %683 = vmatprep.mubr.f32.mxu0 0.0
          %684 = vmatmul.mubr.f32.gmra.mxu0 %v428
          %v685 = vpop.f32.mrf.mxu0
          %v686 = vadd.f32 0.0, %v685
          %v687 = vpop.f32.mrf.mxu0
          %688 = vmatprep.mubr.f32.mxu0 0.0
          %689 = vmatmul.mubr.f32.gmra.mxu0 %v431
          %v690 = vpop.f32.mrf.mxu0
          %v691 = vadd.f32 0.0, %v690
          %v692 = vpop.f32.mrf.mxu0
          %693 = vmatprep.mubr.f32.mxu0 0.0
          %694 = vmatmul.mubr.f32.gmra.mxu0 %v434
          %v695 = vpop.f32.mrf.mxu0
          %v696 = vadd.f32 0.0, %v695
          %v697 = vpop.f32.mrf.mxu0
          %698 = vmatprep.mubr.f32.mxu0 0.0
          %699 = vmatmul.mubr.f32.gmra.mxu0 %v437
          %v700 = vpop.f32.mrf.mxu0
          %v701 = vadd.f32 0.0, %v700
          %v702 = vpop.f32.mrf.mxu0
          %703 = vmatprep.mubr.f32.mxu0 0.0
          %704 = vmatmul.mubr.f32.gmra.mxu0 %v440
          %v705 = vpop.f32.mrf.mxu0
          %v706 = vadd.f32 0.0, %v705
          %v707 = vpop.f32.mrf.mxu0
          %708 = vmatprep.mubr.f32.mxu0 0.0
          %709 = vmatmul.mubr.f32.gmra.mxu0 %v443
          %v710 = vpop.f32.mrf.mxu0
          %v711 = vadd.f32 0.0, %v710
          %v712 = vpop.f32.mrf.mxu0
          %713 = vmatprep.mubr.f32.mxu0 0.0
          %714 = vmatmul.mubr.f32.gmra.mxu0 %v446
          %v715 = vpop.f32.mrf.mxu0
          %v716 = vadd.f32 0.0, %v715
          %v717 = vpop.f32.mrf.mxu0
          %718 = vmatprep.mubr.f32.mxu0 0.0
          %719 = vmatmul.mubr.f32.gmra.mxu0 %v449
          %v720 = vpop.f32.mrf.mxu0
          %v721 = vadd.f32 0.0, %v720
          %v722 = vpop.f32.mrf.mxu0
          %723 = vmatprep.mubr.f32.mxu0 0.0
          %724 = vmatmul.mubr.f32.gmra.mxu0 %v452
          %v725 = vpop.f32.mrf.mxu0
          %v726 = vadd.f32 0.0, %v725
          %v727 = vpop.f32.mrf.mxu0
          %728 = vmatprep.mubr.f32.mxu0 0.0
          %729 = vmatmul.mubr.f32.gmra.mxu0 %v455
          %v730 = vpop.f32.mrf.mxu0
          %v731 = vadd.f32 0.0, %v730
          %v732 = vpop.f32.mrf.mxu0
          %733 = vmatprep.mubr.f32.mxu0 0.0
          %734 = vmatmul.mubr.f32.gmra.mxu0 %v458
          %v735 = vpop.f32.mrf.mxu0
          %v736 = vadd.f32 0.0, %v735
          %v737 = vpop.f32.mrf.mxu0
          %738 = vmatprep.mubr.f32.mxu0 0.0
          %739 = vmatmul.mubr.f32.gmra.mxu0 %v461
          %v740 = vpop.f32.mrf.mxu0
          %v741 = vadd.f32 0.0, %v740
          %v742 = vpop.f32.mrf.mxu0
          %743 = vmatprep.mubr.f32.mxu0 0.0
          %744 = vmatmul.mubr.f32.gmra.mxu0 %v464
          %v745 = vpop.f32.mrf.mxu0
          %v746 = vadd.f32 0.0, %v745
          %v747 = vpop.f32.mrf.mxu0
          %748 = vmatprep.mubr.f32.mxu0 0.0
          %749 = vmatmul.mubr.f32.gmra.mxu0 %v467
          %v750 = vpop.f32.mrf.mxu0
          %v751 = vadd.f32 0.0, %v750
          %v752 = vpop.f32.mrf.mxu0
          %753 = vmatprep.mubr.f32.mxu0 0.0
          %754 = vmatmul.mubr.f32.gmra.mxu0 %v470
          %v755 = vpop.f32.mrf.mxu0
          %v756 = vadd.f32 0.0, %v755
          %v757 = vpop.f32.mrf.mxu0
          %758 = vmatprep.mubr.f32.mxu0 0.0
          %759 = vmatmul.mubr.f32.gmra.mxu0 %v473
          %v760 = vpop.f32.mrf.mxu0
          %v761 = vadd.f32 0.0, %v760
          %v762 = vpop.f32.mrf.mxu0
          %763 = vmatprep.mubr.f32.mxu0 0.0
          %764 = vmatmul.mubr.f32.gmra.mxu0 %v476
          %v765 = vpop.f32.mrf.mxu0
          %v766 = vadd.f32 0.0, %v765
          %v767 = vpop.f32.mrf.mxu0
          %768 = vmatprep.mubr.f32.mxu0 0.0
          %769 = vmatmul.mubr.f32.gmra.mxu0 %v479
          %v770 = vpop.f32.mrf.mxu0
          %v771 = vadd.f32 0.0, %v770
          %v772 = vpop.f32.mrf.mxu0
          %773 = vmatprep.mubr.f32.mxu0 0.0
          %774 = vmatmul.mubr.f32.gmra.mxu0 %v482
          %v775 = vpop.f32.mrf.mxu0
          %v776 = vadd.f32 0.0, %v775
          %v777 = vpop.f32.mrf.mxu0
          %778 = vmatprep.mubr.f32.mxu0 0.0
          %779 = vmatmul.mubr.f32.gmra.mxu0 %v485
          %v780 = vpop.f32.mrf.mxu0
          %v781 = vadd.f32 0.0, %v780
          %v782 = vpop.f32.mrf.mxu0
          %783 = vmatprep.mubr.f32.mxu0 0.0
          %784 = vmatmul.mubr.f32.gmra.mxu0 %v488
          %v785 = vpop.f32.mrf.mxu0
          %v786 = vadd.f32 0.0, %v785
          %v787 = vpop.f32.mrf.mxu0
          %788 = vmatprep.mubr.f32.mxu0 0.0
          %789 = vmatmul.mubr.f32.gmra.mxu0 %v491
          %v790 = vpop.f32.mrf.mxu0
          %v791 = vadd.f32 0.0, %v790
          %v792 = vpop.f32.mrf.mxu0
          %793 = vmatprep.mubr.f32.mxu0 0.0
          %794 = vmatmul.mubr.f32.gmra.mxu0 %v494
          %v795 = vpop.f32.mrf.mxu0
          %v796 = vadd.f32 0.0, %v795
          %v797 = vpop.f32.mrf.mxu0
          %798 = vmatprep.mubr.f32.mxu0 0.0
          %799 = vmatmul.mubr.f32.gmra.mxu0 %v497
          %v800 = vpop.f32.mrf.mxu0
          %v801 = vadd.f32 0.0, %v800
          %v802 = vpop.f32.mrf.mxu0
          %803 = vdwg.mxu0
          %v804 = vld [vmem:[%s1] sm:$0xff]
          %v805 = vld [vmem:[%s1 + $0x8] sm:$0xff]
          %v806 = vld [vmem:[%s1 + $0x10] sm:$0xff]
          %v807 = vld [vmem:[%s1 + $0x18] sm:$0xff]
          %v808 = vld [vmem:[%s1 + $0x20] sm:$0xff]
          %v809 = vld [vmem:[%s1 + $0x28] sm:$0xff]
          %v810 = vld [vmem:[%s1 + $0x30] sm:$0xff]
          %v811 = vld [vmem:[%s1 + $0x38] sm:$0xff]
          %v812 = vld [vmem:[%s1 + $0x40] sm:$0xff]
          %v813 = vld [vmem:[%s1 + $0x48] sm:$0xff]
          %v814 = vld [vmem:[%s1 + $0x50] sm:$0xff]
          %v815 = vld [vmem:[%s1 + $0x58] sm:$0xff]
          %v816 = vld [vmem:[%s1 + $0x60] sm:$0xff]
          %v817 = vld [vmem:[%s1 + $0x68] sm:$0xff]
          %v818 = vld [vmem:[%s1 + $0x70] sm:$0xff]
          %v819 = vld [vmem:[%s1 + $0x78] sm:$0xff]
          %v820 = vld [vmem:[%s1 + $0x80] sm:$0xff]
          %v821 = vld [vmem:[%s1 + $0x88] sm:$0xff]
          %v822 = vld [vmem:[%s1 + $0x90] sm:$0xff]
          %v823 = vld [vmem:[%s1 + $0x98] sm:$0xff]
          %v824 = vld [vmem:[%s1 + $0xa0] sm:$0xff]
          %v825 = vld [vmem:[%s1 + $0xa8] sm:$0xff]
          %v826 = vld [vmem:[%s1 + $0xb0] sm:$0xff]
          %v827 = vld [vmem:[%s1 + $0xb8] sm:$0xff]
          %v828 = vld [vmem:[%s1 + $0xc0] sm:$0xff]
          %v829 = vld [vmem:[%s1 + $0xc8] sm:$0xff]
          %v830 = vld [vmem:[%s1 + $0xd0] sm:$0xff]
          %v831 = vld [vmem:[%s1 + $0xd8] sm:$0xff]
          %v832 = vld [vmem:[%s1 + $0xe0] sm:$0xff]
          %v833 = vld [vmem:[%s1 + $0xe8] sm:$0xff]
          %v834 = vld [vmem:[%s1 + $0xf0] sm:$0xff]
          %v835 = vld [vmem:[%s1 + $0xf8] sm:$0xff]
          %v836 = vld [vmem:[%s1 + $0x100] sm:$0xff]
          %v837 = vld [vmem:[%s1 + $0x108] sm:$0xff]
          %v838 = vld [vmem:[%s1 + $0x110] sm:$0xff]
          %v839 = vld [vmem:[%s1 + $0x118] sm:$0xff]
          %v840 = vld [vmem:[%s1 + $0x120] sm:$0xff]
          %v841 = vld [vmem:[%s1 + $0x128] sm:$0xff]
          %v842 = vld [vmem:[%s1 + $0x130] sm:$0xff]
          %v843 = vld [vmem:[%s1 + $0x138] sm:$0xff]
          %v844 = vld [vmem:[%s1 + $0x140] sm:$0xff]
          %v845 = vld [vmem:[%s1 + $0x148] sm:$0xff]
          %v846 = vld [vmem:[%s1 + $0x150] sm:$0xff]
          %v847 = vld [vmem:[%s1 + $0x158] sm:$0xff]
          %v848 = vld [vmem:[%s1 + $0x160] sm:$0xff]
          %v849 = vld [vmem:[%s1 + $0x168] sm:$0xff]
          %v850 = vld [vmem:[%s1 + $0x170] sm:$0xff]
          %v851 = vld [vmem:[%s1 + $0x178] sm:$0xff]
          %853 = vset.pattern.permute.xlu0 0
          %854 = vperm.xlu0 %853, %v804
          %v855 = vpop.permute.xlu0 %854
          %858 = vset.pattern.permute.xlu0 0
          %859 = vperm.xlu0 %858, %v805
          %v860 = vpop.permute.xlu0 %859
          %863 = vset.pattern.permute.xlu0 0
          %864 = vperm.xlu0 %863, %v806
          %v865 = vpop.permute.xlu0 %864
          %868 = vset.pattern.permute.xlu0 0
          %869 = vperm.xlu0 %868, %v807
          %v870 = vpop.permute.xlu0 %869
          %873 = vset.pattern.permute.xlu0 0
          %874 = vperm.xlu0 %873, %v808
          %v875 = vpop.permute.xlu0 %874
          %878 = vset.pattern.permute.xlu0 0
          %879 = vperm.xlu0 %878, %v809
          %v880 = vpop.permute.xlu0 %879
          %883 = vset.pattern.permute.xlu0 0
          %884 = vperm.xlu0 %883, %v810
          %v885 = vpop.permute.xlu0 %884
          %888 = vset.pattern.permute.xlu0 0
          %889 = vperm.xlu0 %888, %v811
          %v890 = vpop.permute.xlu0 %889
          %893 = vset.pattern.permute.xlu0 0
          %894 = vperm.xlu0 %893, %v812
          %v895 = vpop.permute.xlu0 %894
          %898 = vset.pattern.permute.xlu0 0
          %899 = vperm.xlu0 %898, %v813
          %v900 = vpop.permute.xlu0 %899
          %903 = vset.pattern.permute.xlu0 0
          %904 = vperm.xlu0 %903, %v814
          %v905 = vpop.permute.xlu0 %904
          %908 = vset.pattern.permute.xlu0 0
          %909 = vperm.xlu0 %908, %v815
          %v910 = vpop.permute.xlu0 %909
          %913 = vset.pattern.permute.xlu0 0
          %914 = vperm.xlu0 %913, %v816
          %v915 = vpop.permute.xlu0 %914
          %918 = vset.pattern.permute.xlu0 0
          %919 = vperm.xlu0 %918, %v817
          %v920 = vpop.permute.xlu0 %919
          %923 = vset.pattern.permute.xlu0 0
          %924 = vperm.xlu0 %923, %v818
          %v925 = vpop.permute.xlu0 %924
          %928 = vset.pattern.permute.xlu0 0
          %929 = vperm.xlu0 %928, %v819
          %v930 = vpop.permute.xlu0 %929
          %933 = vset.pattern.permute.xlu0 0
          %934 = vperm.xlu0 %933, %v820
          %v935 = vpop.permute.xlu0 %934
          %938 = vset.pattern.permute.xlu0 0
          %939 = vperm.xlu0 %938, %v821
          %v940 = vpop.permute.xlu0 %939
          %943 = vset.pattern.permute.xlu0 0
          %944 = vperm.xlu0 %943, %v822
          %v945 = vpop.permute.xlu0 %944
          %948 = vset.pattern.permute.xlu0 0
          %949 = vperm.xlu0 %948, %v823
          %v950 = vpop.permute.xlu0 %949
          %953 = vset.pattern.permute.xlu0 0
          %954 = vperm.xlu0 %953, %v824
          %v955 = vpop.permute.xlu0 %954
          %958 = vset.pattern.permute.xlu0 0
          %959 = vperm.xlu0 %958, %v825
          %v960 = vpop.permute.xlu0 %959
          %963 = vset.pattern.permute.xlu0 0
          %964 = vperm.xlu0 %963, %v826
          %v965 = vpop.permute.xlu0 %964
          %968 = vset.pattern.permute.xlu0 0
          %969 = vperm.xlu0 %968, %v827
          %v970 = vpop.permute.xlu0 %969
          %973 = vset.pattern.permute.xlu0 0
          %974 = vperm.xlu0 %973, %v828
          %v975 = vpop.permute.xlu0 %974
          %978 = vset.pattern.permute.xlu0 0
          %979 = vperm.xlu0 %978, %v829
          %v980 = vpop.permute.xlu0 %979
          %983 = vset.pattern.permute.xlu0 0
          %984 = vperm.xlu0 %983, %v830
          %v985 = vpop.permute.xlu0 %984
          %988 = vset.pattern.permute.xlu0 0
          %989 = vperm.xlu0 %988, %v831
          %v990 = vpop.permute.xlu0 %989
          %993 = vset.pattern.permute.xlu0 0
          %994 = vperm.xlu0 %993, %v832
          %v995 = vpop.permute.xlu0 %994
          %998 = vset.pattern.permute.xlu0 0
          %999 = vperm.xlu0 %998, %v833
          %v1000 = vpop.permute.xlu0 %999
          %1003 = vset.pattern.permute.xlu0 0
          %1004 = vperm.xlu0 %1003, %v834
          %v1005 = vpop.permute.xlu0 %1004
          %1008 = vset.pattern.permute.xlu0 0
          %1009 = vperm.xlu0 %1008, %v835
          %v1010 = vpop.permute.xlu0 %1009
          %1013 = vset.pattern.permute.xlu0 0
          %1014 = vperm.xlu0 %1013, %v836
          %v1015 = vpop.permute.xlu0 %1014
          %1018 = vset.pattern.permute.xlu0 0
          %1019 = vperm.xlu0 %1018, %v837
          %v1020 = vpop.permute.xlu0 %1019
          %1023 = vset.pattern.permute.xlu0 0
          %1024 = vperm.xlu0 %1023, %v838
          %v1025 = vpop.permute.xlu0 %1024
          %1028 = vset.pattern.permute.xlu0 0
          %1029 = vperm.xlu0 %1028, %v839
          %v1030 = vpop.permute.xlu0 %1029
          %1033 = vset.pattern.permute.xlu0 0
          %1034 = vperm.xlu0 %1033, %v840
          %v1035 = vpop.permute.xlu0 %1034
          %1038 = vset.pattern.permute.xlu0 0
          %1039 = vperm.xlu0 %1038, %v841
          %v1040 = vpop.permute.xlu0 %1039
          %1043 = vset.pattern.permute.xlu0 0
          %1044 = vperm.xlu0 %1043, %v842
          %v1045 = vpop.permute.xlu0 %1044
          %1048 = vset.pattern.permute.xlu0 0
          %1049 = vperm.xlu0 %1048, %v843
          %v1050 = vpop.permute.xlu0 %1049
          %1053 = vset.pattern.permute.xlu0 0
          %1054 = vperm.xlu0 %1053, %v844
          %v1055 = vpop.permute.xlu0 %1054
          %1058 = vset.pattern.permute.xlu0 0
          %1059 = vperm.xlu0 %1058, %v845
          %v1060 = vpop.permute.xlu0 %1059
          %1063 = vset.pattern.permute.xlu0 0
          %1064 = vperm.xlu0 %1063, %v846
          %v1065 = vpop.permute.xlu0 %1064
          %1068 = vset.pattern.permute.xlu0 0
          %1069 = vperm.xlu0 %1068, %v847
          %v1070 = vpop.permute.xlu0 %1069
          %1073 = vset.pattern.permute.xlu0 0
          %1074 = vperm.xlu0 %1073, %v848
          %v1075 = vpop.permute.xlu0 %1074
          %1078 = vset.pattern.permute.xlu0 0
          %1079 = vperm.xlu0 %1078, %v849
          %v1080 = vpop.permute.xlu0 %1079
          %1083 = vset.pattern.permute.xlu0 0
          %1084 = vperm.xlu0 %1083, %v850
          %v1085 = vpop.permute.xlu0 %1084
          %1088 = vset.pattern.permute.xlu0 0
          %1089 = vperm.xlu0 %1088, %v851
          %v1090 = vpop.permute.xlu0 %1089
          %v1092 = vmul.f32 %v566, %v855
          %v1093 = vmul.f32 %v571, %v860
          %v1094 = vmul.f32 %v576, %v865
          %v1095 = vmul.f32 %v581, %v870
          %v1096 = vmul.f32 %v586, %v875
          %v1097 = vmul.f32 %v591, %v880
          %v1098 = vmul.f32 %v596, %v885
          %v1099 = vmul.f32 %v601, %v890
          %v1100 = vmul.f32 %v606, %v895
          %v1101 = vmul.f32 %v611, %v900
          %v1102 = vmul.f32 %v616, %v905
          %v1103 = vmul.f32 %v621, %v910
          %v1104 = vmul.f32 %v626, %v915
          %v1105 = vmul.f32 %v631, %v920
          %v1106 = vmul.f32 %v636, %v925
          %v1107 = vmul.f32 %v641, %v930
          %v1108 = vmul.f32 %v646, %v935
          %v1109 = vmul.f32 %v651, %v940
          %v1110 = vmul.f32 %v656, %v945
          %v1111 = vmul.f32 %v661, %v950
          %v1112 = vmul.f32 %v666, %v955
          %v1113 = vmul.f32 %v671, %v960
          %v1114 = vmul.f32 %v676, %v965
          %v1115 = vmul.f32 %v681, %v970
          %v1116 = vmul.f32 %v686, %v975
          %v1117 = vmul.f32 %v691, %v980
          %v1118 = vmul.f32 %v696, %v985
          %v1119 = vmul.f32 %v701, %v990
          %v1120 = vmul.f32 %v706, %v995
          %v1121 = vmul.f32 %v711, %v1000
          %v1122 = vmul.f32 %v716, %v1005
          %v1123 = vmul.f32 %v721, %v1010
          %v1124 = vmul.f32 %v726, %v1015
          %v1125 = vmul.f32 %v731, %v1020
          %v1126 = vmul.f32 %v736, %v1025
          %v1127 = vmul.f32 %v741, %v1030
          %v1128 = vmul.f32 %v746, %v1035
          %v1129 = vmul.f32 %v751, %v1040
          %v1130 = vmul.f32 %v756, %v1045
          %v1131 = vmul.f32 %v761, %v1050
          %v1132 = vmul.f32 %v766, %v1055
          %v1133 = vmul.f32 %v771, %v1060
          %v1134 = vmul.f32 %v776, %v1065
          %v1135 = vmul.f32 %v781, %v1070
          %v1136 = vmul.f32 %v786, %v1075
          %v1137 = vmul.f32 %v791, %v1080
          %v1138 = vmul.f32 %v796, %v1085
          %v1139 = vmul.f32 %v801, %v1090
          %v1140 = vpack.c.bf16 %v1093, %v1092
          %v1141 = vpack.c.bf16 %v1095, %v1094
          %v1142 = vpack.c.bf16 %v1097, %v1096
          %v1143 = vpack.c.bf16 %v1099, %v1098
          %v1144 = vpack.c.bf16 %v1101, %v1100
          %v1145 = vpack.c.bf16 %v1103, %v1102
          %v1146 = vpack.c.bf16 %v1105, %v1104
          %v1147 = vpack.c.bf16 %v1107, %v1106
          %v1148 = vpack.c.bf16 %v1109, %v1108
          %v1149 = vpack.c.bf16 %v1111, %v1110
          %v1150 = vpack.c.bf16 %v1113, %v1112
          %v1151 = vpack.c.bf16 %v1115, %v1114
          %v1152 = vpack.c.bf16 %v1117, %v1116
          %v1153 = vpack.c.bf16 %v1119, %v1118
          %v1154 = vpack.c.bf16 %v1121, %v1120
          %v1155 = vpack.c.bf16 %v1123, %v1122
          %v1156 = vpack.c.bf16 %v1125, %v1124
          %v1157 = vpack.c.bf16 %v1127, %v1126
          %v1158 = vpack.c.bf16 %v1129, %v1128
          %v1159 = vpack.c.bf16 %v1131, %v1130
          %v1160 = vpack.c.bf16 %v1133, %v1132
          %v1161 = vpack.c.bf16 %v1135, %v1134
          %v1162 = vpack.c.bf16 %v1137, %v1136
          %v1163 = vpack.c.bf16 %v1139, %v1138
          %v1188 = vunpack.c.l.b16 %v1140
          %v1189 = vunpack.c.h.b16 %v1140
          %v1190 = vunpack.c.l.b16 %v1141
          %v1191 = vunpack.c.h.b16 %v1141
          %v1192 = vunpack.c.l.b16 %v1142
          %v1193 = vunpack.c.h.b16 %v1142
          %v1194 = vunpack.c.l.b16 %v1143
          %v1195 = vunpack.c.h.b16 %v1143
          %v1196 = vunpack.c.l.b16 %v1144
          %v1197 = vunpack.c.h.b16 %v1144
          %v1198 = vunpack.c.l.b16 %v1145
          %v1199 = vunpack.c.h.b16 %v1145
          %v1200 = vunpack.c.l.b16 %v1146
          %v1201 = vunpack.c.h.b16 %v1146
          %v1202 = vunpack.c.l.b16 %v1147
          %v1203 = vunpack.c.h.b16 %v1147
          %v1204 = vunpack.c.l.b16 %v1148
          %v1205 = vunpack.c.h.b16 %v1148
          %v1206 = vunpack.c.l.b16 %v1149
          %v1207 = vunpack.c.h.b16 %v1149
          %v1208 = vunpack.c.l.b16 %v1150
          %v1209 = vunpack.c.h.b16 %v1150
          %v1210 = vunpack.c.l.b16 %v1151
          %v1211 = vunpack.c.h.b16 %v1151
          %v1212 = vunpack.c.l.b16 %v1152
          %v1213 = vunpack.c.h.b16 %v1152
          %v1214 = vunpack.c.l.b16 %v1153
          %v1215 = vunpack.c.h.b16 %v1153
          %v1216 = vunpack.c.l.b16 %v1154
          %v1217 = vunpack.c.h.b16 %v1154
          %v1218 = vunpack.c.l.b16 %v1155
          %v1219 = vunpack.c.h.b16 %v1155
          %v1220 = vunpack.c.l.b16 %v1156
          %v1221 = vunpack.c.h.b16 %v1156
          %v1222 = vunpack.c.l.b16 %v1157
          %v1223 = vunpack.c.h.b16 %v1157
          %v1224 = vunpack.c.l.b16 %v1158
          %v1225 = vunpack.c.h.b16 %v1158
          %v1226 = vunpack.c.l.b16 %v1159
          %v1227 = vunpack.c.h.b16 %v1159
          %v1228 = vunpack.c.l.b16 %v1160
          %v1229 = vunpack.c.h.b16 %v1160
          %v1230 = vunpack.c.l.b16 %v1161
          %v1231 = vunpack.c.h.b16 %v1161
          %v1232 = vunpack.c.l.b16 %v1162
          %v1233 = vunpack.c.h.b16 %v1162
          %v1234 = vunpack.c.l.b16 %v1163
          %v1235 = vunpack.c.h.b16 %v1163
          %v1236 = vpack.c.b16 %v1188, %v1188
          %v1237 = vpack.c.b16 %v1189, %v1189
          %v1238 = vpack.c.b16 %v1190, %v1190
          %v1239 = vpack.c.b16 %v1191, %v1191
          %v1240 = vpack.c.b16 %v1192, %v1192
          %v1241 = vpack.c.b16 %v1193, %v1193
          %v1242 = vpack.c.b16 %v1194, %v1194
          %v1243 = vpack.c.b16 %v1195, %v1195
          %v1244 = vpack.c.b16 %v1196, %v1196
          %v1245 = vpack.c.b16 %v1197, %v1197
          %v1246 = vpack.c.b16 %v1198, %v1198
          %v1247 = vpack.c.b16 %v1199, %v1199
          %v1248 = vpack.c.b16 %v1200, %v1200
          %v1249 = vpack.c.b16 %v1201, %v1201
          %v1250 = vpack.c.b16 %v1202, %v1202
          %v1251 = vpack.c.b16 %v1203, %v1203
          %v1252 = vpack.c.b16 %v1204, %v1204
          %v1253 = vpack.c.b16 %v1205, %v1205
          %v1254 = vpack.c.b16 %v1206, %v1206
          %v1255 = vpack.c.b16 %v1207, %v1207
          %v1256 = vpack.c.b16 %v1208, %v1208
          %v1257 = vpack.c.b16 %v1209, %v1209
          %v1258 = vpack.c.b16 %v1210, %v1210
          %v1259 = vpack.c.b16 %v1211, %v1211
          %v1260 = vpack.c.b16 %v1212, %v1212
          %v1261 = vpack.c.b16 %v1213, %v1213
          %v1262 = vpack.c.b16 %v1214, %v1214
          %v1263 = vpack.c.b16 %v1215, %v1215
          %v1264 = vpack.c.b16 %v1216, %v1216
          %v1265 = vpack.c.b16 %v1217, %v1217
          %v1266 = vpack.c.b16 %v1218, %v1218
          %v1267 = vpack.c.b16 %v1219, %v1219
          %v1268 = vpack.c.b16 %v1220, %v1220
          %v1269 = vpack.c.b16 %v1221, %v1221
          %v1270 = vpack.c.b16 %v1222, %v1222
          %v1271 = vpack.c.b16 %v1223, %v1223
          %v1272 = vpack.c.b16 %v1224, %v1224
          %v1273 = vpack.c.b16 %v1225, %v1225
          %v1274 = vpack.c.b16 %v1226, %v1226
          %v1275 = vpack.c.b16 %v1227, %v1227
          %v1276 = vpack.c.b16 %v1228, %v1228
          %v1277 = vpack.c.b16 %v1229, %v1229
          %v1278 = vpack.c.b16 %v1230, %v1230
          %v1279 = vpack.c.b16 %v1231, %v1231
          %v1280 = vpack.c.b16 %v1232, %v1232
          %v1281 = vpack.c.b16 %v1233, %v1233
          %v1282 = vpack.c.b16 %v1234, %v1234
          %v1283 = vpack.c.b16 %v1235, %v1235
          %vm1332 = vcmask 125952
          %1333 = vst.msk [vmem:[#allocation2] sm:$0xf] %vm1332, %v1236
          %1334 = vst.msk [vmem:[#allocation2 + $0x4] sm:$0xf] %vm1332, %v1237
          %1335 = vst.msk [vmem:[#allocation2 + $0x8] sm:$0xf] %vm1332, %v1238
          %1336 = vst.msk [vmem:[#allocation2 + $0xc] sm:$0xf] %vm1332, %v1239
          %1337 = vst.msk [vmem:[#allocation2 + $0x10] sm:$0xf] %vm1332, %v1240
          %1338 = vst.msk [vmem:[#allocation2 + $0x14] sm:$0xf] %vm1332, %v1241
          %1339 = vst.msk [vmem:[#allocation2 + $0x18] sm:$0xf] %vm1332, %v1242
          %1340 = vst.msk [vmem:[#allocation2 + $0x1c] sm:$0xf] %vm1332, %v1243
          %1341 = vst.msk [vmem:[#allocation2 + $0x20] sm:$0xf] %vm1332, %v1244
          %1342 = vst.msk [vmem:[#allocation2 + $0x24] sm:$0xf] %vm1332, %v1245
          %1343 = vst.msk [vmem:[#allocation2 + $0x28] sm:$0xf] %vm1332, %v1246
          %1344 = vst.msk [vmem:[#allocation2 + $0x2c] sm:$0xf] %vm1332, %v1247
          %1345 = vst.msk [vmem:[#allocation2 + $0x30] sm:$0xf] %vm1332, %v1248
          %1346 = vst.msk [vmem:[#allocation2 + $0x34] sm:$0xf] %vm1332, %v1249
          %1347 = vst.msk [vmem:[#allocation2 + $0x38] sm:$0xf] %vm1332, %v1250
          %1348 = vst.msk [vmem:[#allocation2 + $0x3c] sm:$0xf] %vm1332, %v1251
          %1349 = vst.msk [vmem:[#allocation2 + $0x40] sm:$0xf] %vm1332, %v1252
          %1350 = vst.msk [vmem:[#allocation2 + $0x44] sm:$0xf] %vm1332, %v1253
          %1351 = vst.msk [vmem:[#allocation2 + $0x48] sm:$0xf] %vm1332, %v1254
          %1352 = vst.msk [vmem:[#allocation2 + $0x4c] sm:$0xf] %vm1332, %v1255
          %1353 = vst.msk [vmem:[#allocation2 + $0x50] sm:$0xf] %vm1332, %v1256
          %1354 = vst.msk [vmem:[#allocation2 + $0x54] sm:$0xf] %vm1332, %v1257
          %1355 = vst.msk [vmem:[#allocation2 + $0x58] sm:$0xf] %vm1332, %v1258
          %1356 = vst.msk [vmem:[#allocation2 + $0x5c] sm:$0xf] %vm1332, %v1259
          %1357 = vst.msk [vmem:[#allocation2 + $0x60] sm:$0xf] %vm1332, %v1260
          %1358 = vst.msk [vmem:[#allocation2 + $0x64] sm:$0xf] %vm1332, %v1261
          %1359 = vst.msk [vmem:[#allocation2 + $0x68] sm:$0xf] %vm1332, %v1262
          %1360 = vst.msk [vmem:[#allocation2 + $0x6c] sm:$0xf] %vm1332, %v1263
          %1361 = vst.msk [vmem:[#allocation2 + $0x70] sm:$0xf] %vm1332, %v1264
          %1362 = vst.msk [vmem:[#allocation2 + $0x74] sm:$0xf] %vm1332, %v1265
          %1363 = vst.msk [vmem:[#allocation2 + $0x78] sm:$0xf] %vm1332, %v1266
          %1364 = vst.msk [vmem:[#allocation2 + $0x7c] sm:$0xf] %vm1332, %v1267
          %1365 = vst.msk [vmem:[#allocation2 + $0x80] sm:$0xf] %vm1332, %v1268
          %1366 = vst.msk [vmem:[#allocation2 + $0x84] sm:$0xf] %vm1332, %v1269
          %1367 = vst.msk [vmem:[#allocation2 + $0x88] sm:$0xf] %vm1332, %v1270
          %1368 = vst.msk [vmem:[#allocation2 + $0x8c] sm:$0xf] %vm1332, %v1271
          %1369 = vst.msk [vmem:[#allocation2 + $0x90] sm:$0xf] %vm1332, %v1272
          %1370 = vst.msk [vmem:[#allocation2 + $0x94] sm:$0xf] %vm1332, %v1273
          %1371 = vst.msk [vmem:[#allocation2 + $0x98] sm:$0xf] %vm1332, %v1274
          %1372 = vst.msk [vmem:[#allocation2 + $0x9c] sm:$0xf] %vm1332, %v1275
          %1373 = vst.msk [vmem:[#allocation2 + $0xa0] sm:$0xf] %vm1332, %v1276
          %1374 = vst.msk [vmem:[#allocation2 + $0xa4] sm:$0xf] %vm1332, %v1277
          %1375 = vst.msk [vmem:[#allocation2 + $0xa8] sm:$0xf] %vm1332, %v1278
          %1376 = vst.msk [vmem:[#allocation2 + $0xac] sm:$0xf] %vm1332, %v1279
          %1377 = vst.msk [vmem:[#allocation2 + $0xb0] sm:$0xf] %vm1332, %v1280
          %1378 = vst.msk [vmem:[#allocation2 + $0xb4] sm:$0xf] %vm1332, %v1281
          %1379 = vst.msk [vmem:[#allocation2 + $0xb8] sm:$0xf] %vm1332, %v1282
          %1380 = vst.msk [vmem:[#allocation2 + $0xbc] sm:$0xf] %vm1332, %v1283
          %v1381 = vld [vmem:[%s1] sm:$0xff]
          %v1382 = vld [vmem:[%s1 + $0x8] sm:$0xff]
          %v1383 = vld [vmem:[%s1 + $0x10] sm:$0xff]
          %v1384 = vld [vmem:[%s1 + $0x18] sm:$0xff]
          %v1385 = vld [vmem:[%s1 + $0x20] sm:$0xff]
          %v1386 = vld [vmem:[%s1 + $0x28] sm:$0xff]
          %v1387 = vld [vmem:[%s1 + $0x30] sm:$0xff]
          %v1388 = vld [vmem:[%s1 + $0x38] sm:$0xff]
          %v1389 = vld [vmem:[%s1 + $0x40] sm:$0xff]
          %v1390 = vld [vmem:[%s1 + $0x48] sm:$0xff]
          %v1391 = vld [vmem:[%s1 + $0x50] sm:$0xff]
          %v1392 = vld [vmem:[%s1 + $0x58] sm:$0xff]
          %v1393 = vld [vmem:[%s1 + $0x60] sm:$0xff]
          %v1394 = vld [vmem:[%s1 + $0x68] sm:$0xff]
          %v1395 = vld [vmem:[%s1 + $0x70] sm:$0xff]
          %v1396 = vld [vmem:[%s1 + $0x78] sm:$0xff]
          %v1397 = vld [vmem:[%s1 + $0x80] sm:$0xff]
          %v1398 = vld [vmem:[%s1 + $0x88] sm:$0xff]
          %v1399 = vld [vmem:[%s1 + $0x90] sm:$0xff]
          %v1400 = vld [vmem:[%s1 + $0x98] sm:$0xff]
          %v1401 = vld [vmem:[%s1 + $0xa0] sm:$0xff]
          %v1402 = vld [vmem:[%s1 + $0xa8] sm:$0xff]
          %v1403 = vld [vmem:[%s1 + $0xb0] sm:$0xff]
          %v1404 = vld [vmem:[%s1 + $0xb8] sm:$0xff]
          %v1405 = vld [vmem:[%s1 + $0xc0] sm:$0xff]
          %v1406 = vld [vmem:[%s1 + $0xc8] sm:$0xff]
          %v1407 = vld [vmem:[%s1 + $0xd0] sm:$0xff]
          %v1408 = vld [vmem:[%s1 + $0xd8] sm:$0xff]
          %v1409 = vld [vmem:[%s1 + $0xe0] sm:$0xff]
          %v1410 = vld [vmem:[%s1 + $0xe8] sm:$0xff]
          %v1411 = vld [vmem:[%s1 + $0xf0] sm:$0xff]
          %v1412 = vld [vmem:[%s1 + $0xf8] sm:$0xff]
          %v1413 = vld [vmem:[%s1 + $0x100] sm:$0xff]
          %v1414 = vld [vmem:[%s1 + $0x108] sm:$0xff]
          %v1415 = vld [vmem:[%s1 + $0x110] sm:$0xff]
          %v1416 = vld [vmem:[%s1 + $0x118] sm:$0xff]
          %v1417 = vld [vmem:[%s1 + $0x120] sm:$0xff]
          %v1418 = vld [vmem:[%s1 + $0x128] sm:$0xff]
          %v1419 = vld [vmem:[%s1 + $0x130] sm:$0xff]
          %v1420 = vld [vmem:[%s1 + $0x138] sm:$0xff]
          %v1421 = vld [vmem:[%s1 + $0x140] sm:$0xff]
          %v1422 = vld [vmem:[%s1 + $0x148] sm:$0xff]
          %v1423 = vld [vmem:[%s1 + $0x150] sm:$0xff]
          %v1424 = vld [vmem:[%s1 + $0x158] sm:$0xff]
          %v1425 = vld [vmem:[%s1 + $0x160] sm:$0xff]
          %v1426 = vld [vmem:[%s1 + $0x168] sm:$0xff]
          %v1427 = vld [vmem:[%s1 + $0x170] sm:$0xff]
          %v1428 = vld [vmem:[%s1 + $0x178] sm:$0xff]
          %v1429 = vpack.c.bf16 %v1382, %v1381
          %v1430 = vpack.c.bf16 %v1384, %v1383
          %v1431 = vpack.c.bf16 %v1386, %v1385
          %v1432 = vpack.c.bf16 %v1388, %v1387
          %v1433 = vpack.c.bf16 %v1390, %v1389
          %v1434 = vpack.c.bf16 %v1392, %v1391
          %v1435 = vpack.c.bf16 %v1394, %v1393
          %v1436 = vpack.c.bf16 %v1396, %v1395
          %v1437 = vpack.c.bf16 %v1398, %v1397
          %v1438 = vpack.c.bf16 %v1400, %v1399
          %v1439 = vpack.c.bf16 %v1402, %v1401
          %v1440 = vpack.c.bf16 %v1404, %v1403
          %v1441 = vpack.c.bf16 %v1406, %v1405
          %v1442 = vpack.c.bf16 %v1408, %v1407
          %v1443 = vpack.c.bf16 %v1410, %v1409
          %v1444 = vpack.c.bf16 %v1412, %v1411
          %v1445 = vpack.c.bf16 %v1414, %v1413
          %v1446 = vpack.c.bf16 %v1416, %v1415
          %v1447 = vpack.c.bf16 %v1418, %v1417
          %v1448 = vpack.c.bf16 %v1420, %v1419
          %v1449 = vpack.c.bf16 %v1422, %v1421
          %v1450 = vpack.c.bf16 %v1424, %v1423
          %v1451 = vpack.c.bf16 %v1426, %v1425
          %v1452 = vpack.c.bf16 %v1428, %v1427
          %v1477 = vunpack.c.l.b16 %v1429
          %v1478 = vunpack.c.h.b16 %v1429
          %v1479 = vunpack.c.l.b16 %v1430
          %v1480 = vunpack.c.h.b16 %v1430
          %v1481 = vunpack.c.l.b16 %v1431
          %v1482 = vunpack.c.h.b16 %v1431
          %v1483 = vunpack.c.l.b16 %v1432
          %v1484 = vunpack.c.h.b16 %v1432
          %v1485 = vunpack.c.l.b16 %v1433
          %v1486 = vunpack.c.h.b16 %v1433
          %v1487 = vunpack.c.l.b16 %v1434
          %v1488 = vunpack.c.h.b16 %v1434
          %v1489 = vunpack.c.l.b16 %v1435
          %v1490 = vunpack.c.h.b16 %v1435
          %v1491 = vunpack.c.l.b16 %v1436
          %v1492 = vunpack.c.h.b16 %v1436
          %v1493 = vunpack.c.l.b16 %v1437
          %v1494 = vunpack.c.h.b16 %v1437
          %v1495 = vunpack.c.l.b16 %v1438
          %v1496 = vunpack.c.h.b16 %v1438
          %v1497 = vunpack.c.l.b16 %v1439
          %v1498 = vunpack.c.h.b16 %v1439
          %v1499 = vunpack.c.l.b16 %v1440
          %v1500 = vunpack.c.h.b16 %v1440
          %v1501 = vunpack.c.l.b16 %v1441
          %v1502 = vunpack.c.h.b16 %v1441
          %v1503 = vunpack.c.l.b16 %v1442
          %v1504 = vunpack.c.h.b16 %v1442
          %v1505 = vunpack.c.l.b16 %v1443
          %v1506 = vunpack.c.h.b16 %v1443
          %v1507 = vunpack.c.l.b16 %v1444
          %v1508 = vunpack.c.h.b16 %v1444
          %v1509 = vunpack.c.l.b16 %v1445
          %v1510 = vunpack.c.h.b16 %v1445
          %v1511 = vunpack.c.l.b16 %v1446
          %v1512 = vunpack.c.h.b16 %v1446
          %v1513 = vunpack.c.l.b16 %v1447
          %v1514 = vunpack.c.h.b16 %v1447
          %v1515 = vunpack.c.l.b16 %v1448
          %v1516 = vunpack.c.h.b16 %v1448
          %v1517 = vunpack.c.l.b16 %v1449
          %v1518 = vunpack.c.h.b16 %v1449
          %v1519 = vunpack.c.l.b16 %v1450
          %v1520 = vunpack.c.h.b16 %v1450
          %v1521 = vunpack.c.l.b16 %v1451
          %v1522 = vunpack.c.h.b16 %v1451
          %v1523 = vunpack.c.l.b16 %v1452
          %v1524 = vunpack.c.h.b16 %v1452
          %v1525 = vpack.c.b16 %v1477, %v1477
          %v1526 = vpack.c.b16 %v1478, %v1478
          %v1527 = vpack.c.b16 %v1479, %v1479
          %v1528 = vpack.c.b16 %v1480, %v1480
          %v1529 = vpack.c.b16 %v1481, %v1481
          %v1530 = vpack.c.b16 %v1482, %v1482
          %v1531 = vpack.c.b16 %v1483, %v1483
          %v1532 = vpack.c.b16 %v1484, %v1484
          %v1533 = vpack.c.b16 %v1485, %v1485
          %v1534 = vpack.c.b16 %v1486, %v1486
          %v1535 = vpack.c.b16 %v1487, %v1487
          %v1536 = vpack.c.b16 %v1488, %v1488
          %v1537 = vpack.c.b16 %v1489, %v1489
          %v1538 = vpack.c.b16 %v1490, %v1490
          %v1539 = vpack.c.b16 %v1491, %v1491
          %v1540 = vpack.c.b16 %v1492, %v1492
          %v1541 = vpack.c.b16 %v1493, %v1493
          %v1542 = vpack.c.b16 %v1494, %v1494
          %v1543 = vpack.c.b16 %v1495, %v1495
          %v1544 = vpack.c.b16 %v1496, %v1496
          %v1545 = vpack.c.b16 %v1497, %v1497
          %v1546 = vpack.c.b16 %v1498, %v1498
          %v1547 = vpack.c.b16 %v1499, %v1499
          %v1548 = vpack.c.b16 %v1500, %v1500
          %v1549 = vpack.c.b16 %v1501, %v1501
          %v1550 = vpack.c.b16 %v1502, %v1502
          %v1551 = vpack.c.b16 %v1503, %v1503
          %v1552 = vpack.c.b16 %v1504, %v1504
          %v1553 = vpack.c.b16 %v1505, %v1505
          %v1554 = vpack.c.b16 %v1506, %v1506
          %v1555 = vpack.c.b16 %v1507, %v1507
          %v1556 = vpack.c.b16 %v1508, %v1508
          %v1557 = vpack.c.b16 %v1509, %v1509
          %v1558 = vpack.c.b16 %v1510, %v1510
          %v1559 = vpack.c.b16 %v1511, %v1511
          %v1560 = vpack.c.b16 %v1512, %v1512
          %v1561 = vpack.c.b16 %v1513, %v1513
          %v1562 = vpack.c.b16 %v1514, %v1514
          %v1563 = vpack.c.b16 %v1515, %v1515
          %v1564 = vpack.c.b16 %v1516, %v1516
          %v1565 = vpack.c.b16 %v1517, %v1517
          %v1566 = vpack.c.b16 %v1518, %v1518
          %v1567 = vpack.c.b16 %v1519, %v1519
          %v1568 = vpack.c.b16 %v1520, %v1520
          %v1569 = vpack.c.b16 %v1521, %v1521
          %v1570 = vpack.c.b16 %v1522, %v1522
          %v1571 = vpack.c.b16 %v1523, %v1523
          %v1572 = vpack.c.b16 %v1524, %v1524
          %1573 = vrot.lane.b32.xlu0 %v1525, 16
          %v1574 = vpop.permute.xlu0 %1573
          %1575 = vrot.lane.b32.xlu0 %v1526, 16
          %v1576 = vpop.permute.xlu0 %1575
          %1577 = vrot.lane.b32.xlu0 %v1527, 16
          %v1578 = vpop.permute.xlu0 %1577
          %1579 = vrot.lane.b32.xlu0 %v1528, 16
          %v1580 = vpop.permute.xlu0 %1579
          %1581 = vrot.lane.b32.xlu0 %v1529, 16
          %v1582 = vpop.permute.xlu0 %1581
          %1583 = vrot.lane.b32.xlu0 %v1530, 16
          %v1584 = vpop.permute.xlu0 %1583
          %1585 = vrot.lane.b32.xlu0 %v1531, 16
          %v1586 = vpop.permute.xlu0 %1585
          %1587 = vrot.lane.b32.xlu0 %v1532, 16
          %v1588 = vpop.permute.xlu0 %1587
          %1589 = vrot.lane.b32.xlu0 %v1533, 16
          %v1590 = vpop.permute.xlu0 %1589
          %1591 = vrot.lane.b32.xlu0 %v1534, 16
          %v1592 = vpop.permute.xlu0 %1591
          %1593 = vrot.lane.b32.xlu0 %v1535, 16
          %v1594 = vpop.permute.xlu0 %1593
          %1595 = vrot.lane.b32.xlu0 %v1536, 16
          %v1596 = vpop.permute.xlu0 %1595
          %1597 = vrot.lane.b32.xlu0 %v1537, 16
          %v1598 = vpop.permute.xlu0 %1597
          %1599 = vrot.lane.b32.xlu0 %v1538, 16
          %v1600 = vpop.permute.xlu0 %1599
          %1601 = vrot.lane.b32.xlu0 %v1539, 16
          %v1602 = vpop.permute.xlu0 %1601
          %1603 = vrot.lane.b32.xlu0 %v1540, 16
          %v1604 = vpop.permute.xlu0 %1603
          %1605 = vrot.lane.b32.xlu0 %v1541, 16
          %v1606 = vpop.permute.xlu0 %1605
          %1607 = vrot.lane.b32.xlu0 %v1542, 16
          %v1608 = vpop.permute.xlu0 %1607
          %1609 = vrot.lane.b32.xlu0 %v1543, 16
          %v1610 = vpop.permute.xlu0 %1609
          %1611 = vrot.lane.b32.xlu0 %v1544, 16
          %v1612 = vpop.permute.xlu0 %1611
          %1613 = vrot.lane.b32.xlu0 %v1545, 16
          %v1614 = vpop.permute.xlu0 %1613
          %1615 = vrot.lane.b32.xlu0 %v1546, 16
          %v1616 = vpop.permute.xlu0 %1615
          %1617 = vrot.lane.b32.xlu0 %v1547, 16
          %v1618 = vpop.permute.xlu0 %1617
          %1619 = vrot.lane.b32.xlu0 %v1548, 16
          %v1620 = vpop.permute.xlu0 %1619
          %1621 = vrot.lane.b32.xlu0 %v1549, 16
          %v1622 = vpop.permute.xlu0 %1621
          %1623 = vrot.lane.b32.xlu0 %v1550, 16
          %v1624 = vpop.permute.xlu0 %1623
          %1625 = vrot.lane.b32.xlu0 %v1551, 16
          %v1626 = vpop.permute.xlu0 %1625
          %1627 = vrot.lane.b32.xlu0 %v1552, 16
          %v1628 = vpop.permute.xlu0 %1627
          %1629 = vrot.lane.b32.xlu0 %v1553, 16
          %v1630 = vpop.permute.xlu0 %1629
          %1631 = vrot.lane.b32.xlu0 %v1554, 16
          %v1632 = vpop.permute.xlu0 %1631
          %1633 = vrot.lane.b32.xlu0 %v1555, 16
          %v1634 = vpop.permute.xlu0 %1633
          %1635 = vrot.lane.b32.xlu0 %v1556, 16
          %v1636 = vpop.permute.xlu0 %1635
          %1637 = vrot.lane.b32.xlu0 %v1557, 16
          %v1638 = vpop.permute.xlu0 %1637
          %1639 = vrot.lane.b32.xlu0 %v1558, 16
          %v1640 = vpop.permute.xlu0 %1639
          %1641 = vrot.lane.b32.xlu0 %v1559, 16
          %v1642 = vpop.permute.xlu0 %1641
          %1643 = vrot.lane.b32.xlu0 %v1560, 16
          %v1644 = vpop.permute.xlu0 %1643
          %1645 = vrot.lane.b32.xlu0 %v1561, 16
          %v1646 = vpop.permute.xlu0 %1645
          %1647 = vrot.lane.b32.xlu0 %v1562, 16
          %v1648 = vpop.permute.xlu0 %1647
          %1649 = vrot.lane.b32.xlu0 %v1563, 16
          %v1650 = vpop.permute.xlu0 %1649
          %1651 = vrot.lane.b32.xlu0 %v1564, 16
          %v1652 = vpop.permute.xlu0 %1651
          %1653 = vrot.lane.b32.xlu0 %v1565, 16
          %v1654 = vpop.permute.xlu0 %1653
          %1655 = vrot.lane.b32.xlu0 %v1566, 16
          %v1656 = vpop.permute.xlu0 %1655
          %1657 = vrot.lane.b32.xlu0 %v1567, 16
          %v1658 = vpop.permute.xlu0 %1657
          %1659 = vrot.lane.b32.xlu0 %v1568, 16
          %v1660 = vpop.permute.xlu0 %1659
          %1661 = vrot.lane.b32.xlu0 %v1569, 16
          %v1662 = vpop.permute.xlu0 %1661
          %1663 = vrot.lane.b32.xlu0 %v1570, 16
          %v1664 = vpop.permute.xlu0 %1663
          %1665 = vrot.lane.b32.xlu0 %v1571, 16
          %v1666 = vpop.permute.xlu0 %1665
          %1667 = vrot.lane.b32.xlu0 %v1572, 16
          %v1668 = vpop.permute.xlu0 %1667
          %vm1717 = vcmask 134272
          %1718 = vst.msk [vmem:[#allocation2] sm:$0xf] %vm1717, %v1574
          %1719 = vst.msk [vmem:[#allocation2 + $0x4] sm:$0xf] %vm1717, %v1576
          %1720 = vst.msk [vmem:[#allocation2 + $0x8] sm:$0xf] %vm1717, %v1578
          %1721 = vst.msk [vmem:[#allocation2 + $0xc] sm:$0xf] %vm1717, %v1580
          %1722 = vst.msk [vmem:[#allocation2 + $0x10] sm:$0xf] %vm1717, %v1582
          %1723 = vst.msk [vmem:[#allocation2 + $0x14] sm:$0xf] %vm1717, %v1584
          %1724 = vst.msk [vmem:[#allocation2 + $0x18] sm:$0xf] %vm1717, %v1586
          %1725 = vst.msk [vmem:[#allocation2 + $0x1c] sm:$0xf] %vm1717, %v1588
          %1726 = vst.msk [vmem:[#allocation2 + $0x20] sm:$0xf] %vm1717, %v1590
          %1727 = vst.msk [vmem:[#allocation2 + $0x24] sm:$0xf] %vm1717, %v1592
          %1728 = vst.msk [vmem:[#allocation2 + $0x28] sm:$0xf] %vm1717, %v1594
          %1729 = vst.msk [vmem:[#allocation2 + $0x2c] sm:$0xf] %vm1717, %v1596
          %1730 = vst.msk [vmem:[#allocation2 + $0x30] sm:$0xf] %vm1717, %v1598
          %1731 = vst.msk [vmem:[#allocation2 + $0x34] sm:$0xf] %vm1717, %v1600
          %1732 = vst.msk [vmem:[#allocation2 + $0x38] sm:$0xf] %vm1717, %v1602
          %1733 = vst.msk [vmem:[#allocation2 + $0x3c] sm:$0xf] %vm1717, %v1604
          %1734 = vst.msk [vmem:[#allocation2 + $0x40] sm:$0xf] %vm1717, %v1606
          %1735 = vst.msk [vmem:[#allocation2 + $0x44] sm:$0xf] %vm1717, %v1608
          %1736 = vst.msk [vmem:[#allocation2 + $0x48] sm:$0xf] %vm1717, %v1610
          %1737 = vst.msk [vmem:[#allocation2 + $0x4c] sm:$0xf] %vm1717, %v1612
          %1738 = vst.msk [vmem:[#allocation2 + $0x50] sm:$0xf] %vm1717, %v1614
          %1739 = vst.msk [vmem:[#allocation2 + $0x54] sm:$0xf] %vm1717, %v1616
          %1740 = vst.msk [vmem:[#allocation2 + $0x58] sm:$0xf] %vm1717, %v1618
          %1741 = vst.msk [vmem:[#allocation2 + $0x5c] sm:$0xf] %vm1717, %v1620
          %1742 = vst.msk [vmem:[#allocation2 + $0x60] sm:$0xf] %vm1717, %v1622
          %1743 = vst.msk [vmem:[#allocation2 + $0x64] sm:$0xf] %vm1717, %v1624
          %1744 = vst.msk [vmem:[#allocation2 + $0x68] sm:$0xf] %vm1717, %v1626
          %1745 = vst.msk [vmem:[#allocation2 + $0x6c] sm:$0xf] %vm1717, %v1628
          %1746 = vst.msk [vmem:[#allocation2 + $0x70] sm:$0xf] %vm1717, %v1630
          %1747 = vst.msk [vmem:[#allocation2 + $0x74] sm:$0xf] %vm1717, %v1632
          %1748 = vst.msk [vmem:[#allocation2 + $0x78] sm:$0xf] %vm1717, %v1634
          %1749 = vst.msk [vmem:[#allocation2 + $0x7c] sm:$0xf] %vm1717, %v1636
          %1750 = vst.msk [vmem:[#allocation2 + $0x80] sm:$0xf] %vm1717, %v1638
          %1751 = vst.msk [vmem:[#allocation2 + $0x84] sm:$0xf] %vm1717, %v1640
          %1752 = vst.msk [vmem:[#allocation2 + $0x88] sm:$0xf] %vm1717, %v1642
          %1753 = vst.msk [vmem:[#allocation2 + $0x8c] sm:$0xf] %vm1717, %v1644
          %1754 = vst.msk [vmem:[#allocation2 + $0x90] sm:$0xf] %vm1717, %v1646
          %1755 = vst.msk [vmem:[#allocation2 + $0x94] sm:$0xf] %vm1717, %v1648
          %1756 = vst.msk [vmem:[#allocation2 + $0x98] sm:$0xf] %vm1717, %v1650
          %1757 = vst.msk [vmem:[#allocation2 + $0x9c] sm:$0xf] %vm1717, %v1652
          %1758 = vst.msk [vmem:[#allocation2 + $0xa0] sm:$0xf] %vm1717, %v1654
          %1759 = vst.msk [vmem:[#allocation2 + $0xa4] sm:$0xf] %vm1717, %v1656
          %1760 = vst.msk [vmem:[#allocation2 + $0xa8] sm:$0xf] %vm1717, %v1658
          %1761 = vst.msk [vmem:[#allocation2 + $0xac] sm:$0xf] %vm1717, %v1660
          %1762 = vst.msk [vmem:[#allocation2 + $0xb0] sm:$0xf] %vm1717, %v1662
          %1763 = vst.msk [vmem:[#allocation2 + $0xb4] sm:$0xf] %vm1717, %v1664
          %1764 = vst.msk [vmem:[#allocation2 + $0xb8] sm:$0xf] %vm1717, %v1666
          %1765 = vst.msk [vmem:[#allocation2 + $0xbc] sm:$0xf] %vm1717, %v1668
          %vm1766 = vcmask 122880
          %1767 = vst.msk [vmem:[#allocation3] sm:$0x1] %vm1766, 0.0
        $region56: #{tpu_custom_call.1} parent=51 // pred_fallthru
          _
        %s1768 = smul.u32 %s20, 128
        %s1769 = scalar_lea.vmem %s1, %s1768
        %v1770 = vld [vmem:[%s1769] sm:$0xff]
        %v1771 = vld [vmem:[%s1769 + $0x8] sm:$0xff]
        %v1772 = vld [vmem:[%s1769 + $0x10] sm:$0xff]
        %v1773 = vld [vmem:[%s1769 + $0x18] sm:$0xff]
        %v1774 = vld [vmem:[%s1769 + $0x20] sm:$0xff]
        %v1775 = vld [vmem:[%s1769 + $0x28] sm:$0xff]
        %v1776 = vld [vmem:[%s1769 + $0x30] sm:$0xff]
        %v1777 = vld [vmem:[%s1769 + $0x38] sm:$0xff]
        %v1778 = vld [vmem:[%s1769 + $0x40] sm:$0xff]
        %v1779 = vld [vmem:[%s1769 + $0x48] sm:$0xff]
        %v1780 = vld [vmem:[%s1769 + $0x50] sm:$0xff]
        %v1781 = vld [vmem:[%s1769 + $0x58] sm:$0xff]
        %v1782 = vld [vmem:[%s1769 + $0x60] sm:$0xff]
        %v1783 = vld [vmem:[%s1769 + $0x68] sm:$0xff]
        %v1784 = vld [vmem:[%s1769 + $0x70] sm:$0xff]
        %v1785 = vld [vmem:[%s1769 + $0x78] sm:$0xff]
        %v1786 = vld [vmem:[%s295] sm:$0xff]
        %v1787 = vld [vmem:[%s295 + $0x8] sm:$0xf]
        %v1788 = vld [vmem:[%s295 + $0xc] sm:$0xff]
        %v1789 = vld [vmem:[%s295 + $0x14] sm:$0xf]
        %v1790 = vld [vmem:[%s295 + $0x18] sm:$0xff]
        %v1791 = vld [vmem:[%s295 + $0x20] sm:$0xf]
        %v1792 = vld [vmem:[%s295 + $0x24] sm:$0xff]
        %v1793 = vld [vmem:[%s295 + $0x2c] sm:$0xf]
        %v1794 = vld [vmem:[%s295 + $0x30] sm:$0xff]
        %v1795 = vld [vmem:[%s295 + $0x38] sm:$0xf]
        %v1796 = vld [vmem:[%s295 + $0x3c] sm:$0xff]
        %v1797 = vld [vmem:[%s295 + $0x44] sm:$0xf]
        %v1798 = vld [vmem:[%s295 + $0x48] sm:$0xff]
        %v1799 = vld [vmem:[%s295 + $0x50] sm:$0xf]
        %v1800 = vld [vmem:[%s295 + $0x54] sm:$0xff]
        %v1801 = vld [vmem:[%s295 + $0x5c] sm:$0xf]
        %v1802 = vld [vmem:[%s295 + $0x60] sm:$0xff]
        %v1803 = vld [vmem:[%s295 + $0x68] sm:$0xf]
        %v1804 = vld [vmem:[%s295 + $0x6c] sm:$0xff]
        %v1805 = vld [vmem:[%s295 + $0x74] sm:$0xf]
        %v1806 = vld [vmem:[%s295 + $0x78] sm:$0xff]
        %v1807 = vld [vmem:[%s295 + $0x80] sm:$0xf]
        %v1808 = vld [vmem:[%s295 + $0x84] sm:$0xff]
        %v1809 = vld [vmem:[%s295 + $0x8c] sm:$0xf]
        %v1810 = vld [vmem:[%s295 + $0x90] sm:$0xff]
        %v1811 = vld [vmem:[%s295 + $0x98] sm:$0xf]
        %v1812 = vld [vmem:[%s295 + $0x9c] sm:$0xff]
        %v1813 = vld [vmem:[%s295 + $0xa4] sm:$0xf]
        %v1814 = vld [vmem:[%s295 + $0xa8] sm:$0xff]
        %v1815 = vld [vmem:[%s295 + $0xb0] sm:$0xf]
        %v1816 = vld [vmem:[%s295 + $0xb4] sm:$0xff]
        %v1817 = vld [vmem:[%s295 + $0xbc] sm:$0xf]
        %v1818 = vld [vmem:[#allocation2] sm:$0xf]
        %v1819 = vld [vmem:[#allocation2 + $0x4] sm:$0xf]
        %v1820 = vld [vmem:[#allocation2 + $0x8] sm:$0xf]
        %v1821 = vld [vmem:[#allocation2 + $0xc] sm:$0xf]
        %v1822 = vld [vmem:[#allocation2 + $0x10] sm:$0xf]
        %v1823 = vld [vmem:[#allocation2 + $0x14] sm:$0xf]
        %v1824 = vld [vmem:[#allocation2 + $0x18] sm:$0xf]
        %v1825 = vld [vmem:[#allocation2 + $0x1c] sm:$0xf]
        %v1826 = vld [vmem:[#allocation2 + $0x20] sm:$0xf]
        %v1827 = vld [vmem:[#allocation2 + $0x24] sm:$0xf]
        %v1828 = vld [vmem:[#allocation2 + $0x28] sm:$0xf]
        %v1829 = vld [vmem:[#allocation2 + $0x2c] sm:$0xf]
        %v1830 = vld [vmem:[#allocation2 + $0x30] sm:$0xf]
        %v1831 = vld [vmem:[#allocation2 + $0x34] sm:$0xf]
        %v1832 = vld [vmem:[#allocation2 + $0x38] sm:$0xf]
        %v1833 = vld [vmem:[#allocation2 + $0x3c] sm:$0xf]
        %v1834 = vld [vmem:[#allocation2 + $0x40] sm:$0xf]
        %v1835 = vld [vmem:[#allocation2 + $0x44] sm:$0xf]
        %v1836 = vld [vmem:[#allocation2 + $0x48] sm:$0xf]
        %v1837 = vld [vmem:[#allocation2 + $0x4c] sm:$0xf]
        %v1838 = vld [vmem:[#allocation2 + $0x50] sm:$0xf]
        %v1839 = vld [vmem:[#allocation2 + $0x54] sm:$0xf]
        %v1840 = vld [vmem:[#allocation2 + $0x58] sm:$0xf]
        %v1841 = vld [vmem:[#allocation2 + $0x5c] sm:$0xf]
        %v1842 = vld [vmem:[#allocation2 + $0x60] sm:$0xf]
        %v1843 = vld [vmem:[#allocation2 + $0x64] sm:$0xf]
        %v1844 = vld [vmem:[#allocation2 + $0x68] sm:$0xf]
        %v1845 = vld [vmem:[#allocation2 + $0x6c] sm:$0xf]
        %v1846 = vld [vmem:[#allocation2 + $0x70] sm:$0xf]
        %v1847 = vld [vmem:[#allocation2 + $0x74] sm:$0xf]
        %v1848 = vld [vmem:[#allocation2 + $0x78] sm:$0xf]
        %v1849 = vld [vmem:[#allocation2 + $0x7c] sm:$0xf]
        %v1850 = vld [vmem:[#allocation2 + $0x80] sm:$0xf]
        %v1851 = vld [vmem:[#allocation2 + $0x84] sm:$0xf]
        %v1852 = vld [vmem:[#allocation2 + $0x88] sm:$0xf]
        %v1853 = vld [vmem:[#allocation2 + $0x8c] sm:$0xf]
        %v1854 = vld [vmem:[#allocation2 + $0x90] sm:$0xf]
        %v1855 = vld [vmem:[#allocation2 + $0x94] sm:$0xf]
        %v1856 = vld [vmem:[#allocation2 + $0x98] sm:$0xf]
        %v1857 = vld [vmem:[#allocation2 + $0x9c] sm:$0xf]
        %v1858 = vld [vmem:[#allocation2 + $0xa0] sm:$0xf]
        %v1859 = vld [vmem:[#allocation2 + $0xa4] sm:$0xf]
        %v1860 = vld [vmem:[#allocation2 + $0xa8] sm:$0xf]
        %v1861 = vld [vmem:[#allocation2 + $0xac] sm:$0xf]
        %v1862 = vld [vmem:[#allocation2 + $0xb0] sm:$0xf]
        %v1863 = vld [vmem:[#allocation2 + $0xb4] sm:$0xf]
        %v1864 = vld [vmem:[#allocation2 + $0xb8] sm:$0xf]
        %v1865 = vld [vmem:[#allocation2 + $0xbc] sm:$0xf]
        %v1898 = vunpack.c.l.b16 %v1786
        %v1899 = vunpack.c.h.b16 %v1786
        %v1900 = vunpack.c.l.b16 %v1787
        %v1901 = vunpack.c.l.b16 %v1788
        %v1902 = vunpack.c.h.b16 %v1788
        %v1903 = vunpack.c.l.b16 %v1789
        %v1904 = vunpack.c.l.b16 %v1790
        %v1905 = vunpack.c.h.b16 %v1790
        %v1906 = vunpack.c.l.b16 %v1791
        %v1907 = vunpack.c.l.b16 %v1792
        %v1908 = vunpack.c.h.b16 %v1792
        %v1909 = vunpack.c.l.b16 %v1793
        %v1910 = vunpack.c.l.b16 %v1794
        %v1911 = vunpack.c.h.b16 %v1794
        %v1912 = vunpack.c.l.b16 %v1795
        %v1913 = vunpack.c.l.b16 %v1796
        %v1914 = vunpack.c.h.b16 %v1796
        %v1915 = vunpack.c.l.b16 %v1797
        %v1916 = vunpack.c.l.b16 %v1798
        %v1917 = vunpack.c.h.b16 %v1798
        %v1918 = vunpack.c.l.b16 %v1799
        %v1919 = vunpack.c.l.b16 %v1800
        %v1920 = vunpack.c.h.b16 %v1800
        %v1921 = vunpack.c.l.b16 %v1801
        %v1922 = vunpack.c.l.b16 %v1802
        %v1923 = vunpack.c.h.b16 %v1802
        %v1924 = vunpack.c.l.b16 %v1803
        %v1925 = vunpack.c.l.b16 %v1804
        %v1926 = vunpack.c.h.b16 %v1804
        %v1927 = vunpack.c.l.b16 %v1805
        %v1928 = vunpack.c.l.b16 %v1806
        %v1929 = vunpack.c.h.b16 %v1806
        %v1930 = vunpack.c.l.b16 %v1807
        %v1931 = vunpack.c.l.b16 %v1808
        %v1932 = vunpack.c.h.b16 %v1808
        %v1933 = vunpack.c.l.b16 %v1809
        %v1934 = vunpack.c.l.b16 %v1810
        %v1935 = vunpack.c.h.b16 %v1810
        %v1936 = vunpack.c.l.b16 %v1811
        %v1937 = vunpack.c.l.b16 %v1812
        %v1938 = vunpack.c.h.b16 %v1812
        %v1939 = vunpack.c.l.b16 %v1813
        %v1940 = vunpack.c.l.b16 %v1814
        %v1941 = vunpack.c.h.b16 %v1814
        %v1942 = vunpack.c.l.b16 %v1815
        %v1943 = vunpack.c.l.b16 %v1816
        %v1944 = vunpack.c.h.b16 %v1816
        %v1945 = vunpack.c.l.b16 %v1817
        %v1946 = vpack.c.b16 %v1901, %v1898
        %v1947 = vpack.c.b16 %v1902, %v1899
        %v1948 = vpack.c.b16 %v1903, %v1900
        %v1949 = vpack.c.b16 %v1907, %v1904
        %v1950 = vpack.c.b16 %v1908, %v1905
        %v1951 = vpack.c.b16 %v1909, %v1906
        %v1952 = vpack.c.b16 %v1913, %v1910
        %v1953 = vpack.c.b16 %v1914, %v1911
        %v1954 = vpack.c.b16 %v1915, %v1912
        %v1955 = vpack.c.b16 %v1919, %v1916
        %v1956 = vpack.c.b16 %v1920, %v1917
        %v1957 = vpack.c.b16 %v1921, %v1918
        %v1958 = vpack.c.b16 %v1925, %v1922
        %v1959 = vpack.c.b16 %v1926, %v1923
        %v1960 = vpack.c.b16 %v1927, %v1924
        %v1961 = vpack.c.b16 %v1931, %v1928
        %v1962 = vpack.c.b16 %v1932, %v1929
        %v1963 = vpack.c.b16 %v1933, %v1930
        %v1964 = vpack.c.b16 %v1937, %v1934
        %v1965 = vpack.c.b16 %v1938, %v1935
        %v1966 = vpack.c.b16 %v1939, %v1936
        %v1967 = vpack.c.b16 %v1943, %v1940
        %v1968 = vpack.c.b16 %v1944, %v1941
        %v1969 = vpack.c.b16 %v1945, %v1942
        %v2042 = vunpack.c.l.b16 %v1818
        %v2043 = vunpack.c.l.b16 %v1819
        %v2044 = vunpack.c.l.b16 %v1820
        %v2045 = vunpack.c.l.b16 %v1821
        %v2046 = vunpack.c.l.b16 %v1822
        %v2047 = vunpack.c.l.b16 %v1823
        %v2048 = vunpack.c.l.b16 %v1824
        %v2049 = vunpack.c.l.b16 %v1825
        %v2050 = vunpack.c.l.b16 %v1826
        %v2051 = vunpack.c.l.b16 %v1827
        %v2052 = vunpack.c.l.b16 %v1828
        %v2053 = vunpack.c.l.b16 %v1829
        %v2054 = vunpack.c.l.b16 %v1830
        %v2055 = vunpack.c.l.b16 %v1831
        %v2056 = vunpack.c.l.b16 %v1832
        %v2057 = vunpack.c.l.b16 %v1833
        %v2058 = vunpack.c.l.b16 %v1834
        %v2059 = vunpack.c.l.b16 %v1835
        %v2060 = vunpack.c.l.b16 %v1836
        %v2061 = vunpack.c.l.b16 %v1837
        %v2062 = vunpack.c.l.b16 %v1838
        %v2063 = vunpack.c.l.b16 %v1839
        %v2064 = vunpack.c.l.b16 %v1840
        %v2065 = vunpack.c.l.b16 %v1841
        %v2066 = vunpack.c.l.b16 %v1842
        %v2067 = vunpack.c.l.b16 %v1843
        %v2068 = vunpack.c.l.b16 %v1844
        %v2069 = vunpack.c.l.b16 %v1845
        %v2070 = vunpack.c.l.b16 %v1846
        %v2071 = vunpack.c.l.b16 %v1847
        %v2072 = vunpack.c.l.b16 %v1848
        %v2073 = vunpack.c.l.b16 %v1849
        %v2074 = vunpack.c.l.b16 %v1850
        %v2075 = vunpack.c.l.b16 %v1851
        %v2076 = vunpack.c.l.b16 %v1852
        %v2077 = vunpack.c.l.b16 %v1853
        %v2078 = vunpack.c.l.b16 %v1854
        %v2079 = vunpack.c.l.b16 %v1855
        %v2080 = vunpack.c.l.b16 %v1856
        %v2081 = vunpack.c.l.b16 %v1857
        %v2082 = vunpack.c.l.b16 %v1858
        %v2083 = vunpack.c.l.b16 %v1859
        %v2084 = vunpack.c.l.b16 %v1860
        %v2085 = vunpack.c.l.b16 %v1861
        %v2086 = vunpack.c.l.b16 %v1862
        %v2087 = vunpack.c.l.b16 %v1863
        %v2088 = vunpack.c.l.b16 %v1864
        %v2089 = vunpack.c.l.b16 %v1865
        %v2090 = vpack.c.b16 %v2043, %v2042
        %v2091 = vpack.c.b16 %v2045, %v2044
        %v2092 = vpack.c.b16 %v2047, %v2046
        %v2093 = vpack.c.b16 %v2049, %v2048
        %v2094 = vpack.c.b16 %v2051, %v2050
        %v2095 = vpack.c.b16 %v2053, %v2052
        %v2096 = vpack.c.b16 %v2055, %v2054
        %v2097 = vpack.c.b16 %v2057, %v2056
        %v2098 = vpack.c.b16 %v2059, %v2058
        %v2099 = vpack.c.b16 %v2061, %v2060
        %v2100 = vpack.c.b16 %v2063, %v2062
        %v2101 = vpack.c.b16 %v2065, %v2064
        %v2102 = vpack.c.b16 %v2067, %v2066
        %v2103 = vpack.c.b16 %v2069, %v2068
        %v2104 = vpack.c.b16 %v2071, %v2070
        %v2105 = vpack.c.b16 %v2073, %v2072
        %v2106 = vpack.c.b16 %v2075, %v2074
        %v2107 = vpack.c.b16 %v2077, %v2076
        %v2108 = vpack.c.b16 %v2079, %v2078
        %v2109 = vpack.c.b16 %v2081, %v2080
        %v2110 = vpack.c.b16 %v2083, %v2082
        %v2111 = vpack.c.b16 %v2085, %v2084
        %v2112 = vpack.c.b16 %v2087, %v2086
        %v2113 = vpack.c.b16 %v2089, %v2088
        %2138 = vmatprep.subr.bf16.mxu0 0
        %2139 = vmatpush1.bf16.msra.mxu0 %v2097
        %2140 = vmatprep.subr.bf16.mxu0 0
        %2141 = vmatpush1.bf16.msra.mxu0 %v2096
        %2142 = vmatprep.subr.bf16.mxu0 0
        %2143 = vmatpush1.bf16.msra.mxu0 %v2095
        %2144 = vmatprep.subr.bf16.mxu0 0
        %2145 = vmatpush1.bf16.msra.mxu0 %v2094
        %2146 = vmatprep.subr.bf16.mxu0 0
        %2147 = vmatpush1.bf16.msra.mxu0 %v2093
        %2148 = vmatprep.subr.bf16.mxu0 0
        %2149 = vmatpush1.bf16.msra.mxu0 %v2092
        %2150 = vmatprep.subr.bf16.mxu0 0
        %2151 = vmatpush1.bf16.msra.mxu0 %v2091
        %2152 = vmatprep.subr.bf16.mxu0 0
        %2153 = vmatpush1.bf16.msra.mxu0 %v2090
        %2154 = vmatprep.subr.bf16.mxu0 0
        %2155 = vmatpush2.bf16.msra.mxu0 %v2105
        %2156 = vmatprep.subr.bf16.mxu0 0
        %2157 = vmatpush2.bf16.msra.mxu0 %v2104
        %2158 = vmatprep.subr.bf16.mxu0 0
        %2159 = vmatpush2.bf16.msra.mxu0 %v2103
        %2160 = vmatprep.subr.bf16.mxu0 0
        %2161 = vmatpush2.bf16.msra.mxu0 %v2102
        %2162 = vmatprep.subr.bf16.mxu0 0
        %2163 = vmatpush2.bf16.msra.mxu0 %v2101
        %2164 = vmatprep.subr.bf16.mxu0 0
        %2165 = vmatpush2.bf16.msra.mxu0 %v2100
        %2166 = vmatprep.subr.bf16.mxu0 0
        %2167 = vmatpush2.bf16.msra.mxu0 %v2099
        %2168 = vmatprep.subr.bf16.mxu0 0
        %2169 = vmatpush2.bf16.msra.mxu0 %v2098
        %2170 = vmatprep.mubr.bf16.mxu0 %v1947
        %2171 = vmatmul.mubr.bf16.gmra.mxu0 %v1946
        %v2172 = vpop.f32.mrf.mxu0
        %v2173 = vadd.f32 0.0, %v2172
        %v2174 = vpop.f32.mrf.mxu0
        %v2175 = vpop.f32.mrf.mxu0
        %v2176 = vadd.f32 0.0, %v2175
        %v2177 = vpop.f32.mrf.mxu0
        %2178 = vmatprep.mubr.bf16.mxu0 %v1950
        %2179 = vmatmul.mubr.bf16.gmra.mxu0 %v1949
        %v2180 = vpop.f32.mrf.mxu0
        %v2181 = vadd.f32 0.0, %v2180
        %v2182 = vpop.f32.mrf.mxu0
        %v2183 = vpop.f32.mrf.mxu0
        %v2184 = vadd.f32 0.0, %v2183
        %v2185 = vpop.f32.mrf.mxu0
        %2186 = vmatprep.mubr.bf16.mxu0 %v1953
        %2187 = vmatmul.mubr.bf16.gmra.mxu0 %v1952
        %v2188 = vpop.f32.mrf.mxu0
        %v2189 = vadd.f32 0.0, %v2188
        %v2190 = vpop.f32.mrf.mxu0
        %v2191 = vpop.f32.mrf.mxu0
        %v2192 = vadd.f32 0.0, %v2191
        %v2193 = vpop.f32.mrf.mxu0
        %2194 = vmatprep.mubr.bf16.mxu0 %v1956
        %2195 = vmatmul.mubr.bf16.gmra.mxu0 %v1955
        %v2196 = vpop.f32.mrf.mxu0
        %v2197 = vadd.f32 0.0, %v2196
        %v2198 = vpop.f32.mrf.mxu0
        %v2199 = vpop.f32.mrf.mxu0
        %v2200 = vadd.f32 0.0, %v2199
        %v2201 = vpop.f32.mrf.mxu0
        %2202 = vmatprep.mubr.bf16.mxu0 %v1959
        %2203 = vmatmul.mubr.bf16.gmra.mxu0 %v1958
        %v2204 = vpop.f32.mrf.mxu0
        %v2205 = vadd.f32 0.0, %v2204
        %v2206 = vpop.f32.mrf.mxu0
        %v2207 = vpop.f32.mrf.mxu0
        %v2208 = vadd.f32 0.0, %v2207
        %v2209 = vpop.f32.mrf.mxu0
        %2210 = vmatprep.mubr.bf16.mxu0 %v1962
        %2211 = vmatmul.mubr.bf16.gmra.mxu0 %v1961
        %v2212 = vpop.f32.mrf.mxu0
        %v2213 = vadd.f32 0.0, %v2212
        %v2214 = vpop.f32.mrf.mxu0
        %v2215 = vpop.f32.mrf.mxu0
        %v2216 = vadd.f32 0.0, %v2215
        %v2217 = vpop.f32.mrf.mxu0
        %2218 = vmatprep.mubr.bf16.mxu0 %v1965
        %2219 = vmatmul.mubr.bf16.gmra.mxu0 %v1964
        %v2220 = vpop.f32.mrf.mxu0
        %v2221 = vadd.f32 0.0, %v2220
        %v2222 = vpop.f32.mrf.mxu0
        %v2223 = vpop.f32.mrf.mxu0
        %v2224 = vadd.f32 0.0, %v2223
        %v2225 = vpop.f32.mrf.mxu0
        %2226 = vmatprep.mubr.bf16.mxu0 %v1968
        %2227 = vmatmul.mubr.bf16.gmra.mxu0 %v1967
        %v2228 = vpop.f32.mrf.mxu0
        %v2229 = vadd.f32 0.0, %v2228
        %v2230 = vpop.f32.mrf.mxu0
        %v2231 = vpop.f32.mrf.mxu0
        %v2232 = vadd.f32 0.0, %v2231
        %v2233 = vpop.f32.mrf.mxu0
        %2234 = vdwg.mxu0
        %2235 = vmatprep.subr.bf16.mxu0 0
        %2236 = vmatpush1.bf16.msra.mxu0 %v2113
        %2237 = vmatprep.subr.bf16.mxu0 0
        %2238 = vmatpush1.bf16.msra.mxu0 %v2112
        %2239 = vmatprep.subr.bf16.mxu0 0
        %2240 = vmatpush1.bf16.msra.mxu0 %v2111
        %2241 = vmatprep.subr.bf16.mxu0 0
        %2242 = vmatpush1.bf16.msra.mxu0 %v2110
        %2243 = vmatprep.subr.bf16.mxu0 0
        %2244 = vmatpush1.bf16.msra.mxu0 %v2109
        %2245 = vmatprep.subr.bf16.mxu0 0
        %2246 = vmatpush1.bf16.msra.mxu0 %v2108
        %2247 = vmatprep.subr.bf16.mxu0 0
        %2248 = vmatpush1.bf16.msra.mxu0 %v2107
        %2249 = vmatprep.subr.bf16.mxu0 0
        %2250 = vmatpush1.bf16.msra.mxu0 %v2106
        %2251 = vmatprep.subr.bf16.mxu0 0
        %2252 = vmatpush2.bf16.msra.mxu0 0
        %2253 = vmatprep.subr.bf16.mxu0 0
        %2254 = vmatpush2.bf16.msra.mxu0 0
        %2255 = vmatprep.subr.bf16.mxu0 0
        %2256 = vmatpush2.bf16.msra.mxu0 0
        %2257 = vmatprep.subr.bf16.mxu0 0
        %2258 = vmatpush2.bf16.msra.mxu0 0
        %2259 = vmatprep.subr.bf16.mxu0 0
        %2260 = vmatpush2.bf16.msra.mxu0 0
        %2261 = vmatprep.subr.bf16.mxu0 0
        %2262 = vmatpush2.bf16.msra.mxu0 0
        %2263 = vmatprep.subr.bf16.mxu0 0
        %2264 = vmatpush2.bf16.msra.mxu0 0
        %2265 = vmatprep.subr.bf16.mxu0 0
        %2266 = vmatpush2.bf16.msra.mxu0 0
        %2267 = vmatprep.mubr.bf16.mxu0 0
        %2268 = vmatmul.mubr.bf16.gmra.mxu0 %v1948
        %v2269 = vpop.f32.mrf.mxu0
        %v2270 = vadd.f32 %v2173, %v2269
        %v2271 = vpop.f32.mrf.mxu0
        %v2272 = vpop.f32.mrf.mxu0
        %v2273 = vadd.f32 %v2176, %v2272
        %v2274 = vpop.f32.mrf.mxu0
        %2275 = vmatprep.mubr.bf16.mxu0 0
        %2276 = vmatmul.mubr.bf16.gmra.mxu0 %v1951
        %v2277 = vpop.f32.mrf.mxu0
        %v2278 = vadd.f32 %v2181, %v2277
        %v2279 = vpop.f32.mrf.mxu0
        %v2280 = vpop.f32.mrf.mxu0
        %v2281 = vadd.f32 %v2184, %v2280
        %v2282 = vpop.f32.mrf.mxu0
        %2283 = vmatprep.mubr.bf16.mxu0 0
        %2284 = vmatmul.mubr.bf16.gmra.mxu0 %v1954
        %v2285 = vpop.f32.mrf.mxu0
        %v2286 = vadd.f32 %v2189, %v2285
        %v2287 = vpop.f32.mrf.mxu0
        %v2288 = vpop.f32.mrf.mxu0
        %v2289 = vadd.f32 %v2192, %v2288
        %v2290 = vpop.f32.mrf.mxu0
        %2291 = vmatprep.mubr.bf16.mxu0 0
        %2292 = vmatmul.mubr.bf16.gmra.mxu0 %v1957
        %v2293 = vpop.f32.mrf.mxu0
        %v2294 = vadd.f32 %v2197, %v2293
        %v2295 = vpop.f32.mrf.mxu0
        %v2296 = vpop.f32.mrf.mxu0
        %v2297 = vadd.f32 %v2200, %v2296
        %v2298 = vpop.f32.mrf.mxu0
        %2299 = vmatprep.mubr.bf16.mxu0 0
        %2300 = vmatmul.mubr.bf16.gmra.mxu0 %v1960
        %v2301 = vpop.f32.mrf.mxu0
        %v2302 = vadd.f32 %v2205, %v2301
        %v2303 = vpop.f32.mrf.mxu0
        %v2304 = vpop.f32.mrf.mxu0
        %v2305 = vadd.f32 %v2208, %v2304
        %v2306 = vpop.f32.mrf.mxu0
        %2307 = vmatprep.mubr.bf16.mxu0 0
        %2308 = vmatmul.mubr.bf16.gmra.mxu0 %v1963
        %v2309 = vpop.f32.mrf.mxu0
        %v2310 = vadd.f32 %v2213, %v2309
        %v2311 = vpop.f32.mrf.mxu0
        %v2312 = vpop.f32.mrf.mxu0
        %v2313 = vadd.f32 %v2216, %v2312
        %v2314 = vpop.f32.mrf.mxu0
        %2315 = vmatprep.mubr.bf16.mxu0 0
        %2316 = vmatmul.mubr.bf16.gmra.mxu0 %v1966
        %v2317 = vpop.f32.mrf.mxu0
        %v2318 = vadd.f32 %v2221, %v2317
        %v2319 = vpop.f32.mrf.mxu0
        %v2320 = vpop.f32.mrf.mxu0
        %v2321 = vadd.f32 %v2224, %v2320
        %v2322 = vpop.f32.mrf.mxu0
        %2323 = vmatprep.mubr.bf16.mxu0 0
        %2324 = vmatmul.mubr.bf16.gmra.mxu0 %v1969
        %v2325 = vpop.f32.mrf.mxu0
        %v2326 = vadd.f32 %v2229, %v2325
        %v2327 = vpop.f32.mrf.mxu0
        %v2328 = vpop.f32.mrf.mxu0
        %v2329 = vadd.f32 %v2232, %v2328
        %v2330 = vpop.f32.mrf.mxu0
        %2331 = vdwg.mxu0
        %2333 = vset.pattern.permute.xlu0 0
        %2334 = vperm.xlu0 %2333, %v1770
        %v2335 = vpop.permute.xlu0 %2334
        %2338 = vset.pattern.permute.xlu0 0
        %2339 = vperm.xlu0 %2338, %v1771
        %v2340 = vpop.permute.xlu0 %2339
        %2343 = vset.pattern.permute.xlu0 0
        %2344 = vperm.xlu0 %2343, %v1772
        %v2345 = vpop.permute.xlu0 %2344
        %2348 = vset.pattern.permute.xlu0 0
        %2349 = vperm.xlu0 %2348, %v1773
        %v2350 = vpop.permute.xlu0 %2349
        %2353 = vset.pattern.permute.xlu0 0
        %2354 = vperm.xlu0 %2353, %v1774
        %v2355 = vpop.permute.xlu0 %2354
        %2358 = vset.pattern.permute.xlu0 0
        %2359 = vperm.xlu0 %2358, %v1775
        %v2360 = vpop.permute.xlu0 %2359
        %2363 = vset.pattern.permute.xlu0 0
        %2364 = vperm.xlu0 %2363, %v1776
        %v2365 = vpop.permute.xlu0 %2364
        %2368 = vset.pattern.permute.xlu0 0
        %2369 = vperm.xlu0 %2368, %v1777
        %v2370 = vpop.permute.xlu0 %2369
        %2373 = vset.pattern.permute.xlu0 0
        %2374 = vperm.xlu0 %2373, %v1778
        %v2375 = vpop.permute.xlu0 %2374
        %2378 = vset.pattern.permute.xlu0 0
        %2379 = vperm.xlu0 %2378, %v1779
        %v2380 = vpop.permute.xlu0 %2379
        %2383 = vset.pattern.permute.xlu0 0
        %2384 = vperm.xlu0 %2383, %v1780
        %v2385 = vpop.permute.xlu0 %2384
        %2388 = vset.pattern.permute.xlu0 0
        %2389 = vperm.xlu0 %2388, %v1781
        %v2390 = vpop.permute.xlu0 %2389
        %2393 = vset.pattern.permute.xlu0 0
        %2394 = vperm.xlu0 %2393, %v1782
        %v2395 = vpop.permute.xlu0 %2394
        %2398 = vset.pattern.permute.xlu0 0
        %2399 = vperm.xlu0 %2398, %v1783
        %v2400 = vpop.permute.xlu0 %2399
        %2403 = vset.pattern.permute.xlu0 0
        %2404 = vperm.xlu0 %2403, %v1784
        %v2405 = vpop.permute.xlu0 %2404
        %2408 = vset.pattern.permute.xlu0 0
        %2409 = vperm.xlu0 %2408, %v1785
        %v2410 = vpop.permute.xlu0 %2409
        %v2412 = vmul.f32 %v2270, %v2335
        %v2413 = vmul.f32 %v2273, %v2340
        %v2414 = vmul.f32 %v2278, %v2345
        %v2415 = vmul.f32 %v2281, %v2350
        %v2416 = vmul.f32 %v2286, %v2355
        %v2417 = vmul.f32 %v2289, %v2360
        %v2418 = vmul.f32 %v2294, %v2365
        %v2419 = vmul.f32 %v2297, %v2370
        %v2420 = vmul.f32 %v2302, %v2375
        %v2421 = vmul.f32 %v2305, %v2380
        %v2422 = vmul.f32 %v2310, %v2385
        %v2423 = vmul.f32 %v2313, %v2390
        %v2424 = vmul.f32 %v2318, %v2395
        %v2425 = vmul.f32 %v2321, %v2400
        %v2426 = vmul.f32 %v2326, %v2405
        %v2427 = vmul.f32 %v2329, %v2410
        %v2428 = vld [vmem:[%s5] sm:$0x1]
        %v2430 = vlaneseq
        %v2431 = vshrl.u32 %v2430, 7
        %v2432 = vsub.s32 0, %v2431
        %v2433 = vrot.slane %v2428, %v2432
        %v2435 = vadd.f32 %v2412, %v2433
        %v2436 = vadd.f32 %v2413, %v2433
        %v2437 = vadd.f32 %v2414, %v2433
        %v2438 = vadd.f32 %v2415, %v2433
        %v2439 = vadd.f32 %v2416, %v2433
        %v2440 = vadd.f32 %v2417, %v2433
        %v2441 = vadd.f32 %v2418, %v2433
        %v2442 = vadd.f32 %v2419, %v2433
        %v2443 = vadd.f32 %v2420, %v2433
        %v2444 = vadd.f32 %v2421, %v2433
        %v2445 = vadd.f32 %v2422, %v2433
        %v2446 = vadd.f32 %v2423, %v2433
        %v2447 = vadd.f32 %v2424, %v2433
        %v2448 = vadd.f32 %v2425, %v2433
        %v2449 = vadd.f32 %v2426, %v2433
        %v2450 = vadd.f32 %v2427, %v2433
        %v2451 = vmax.f32 %v2435, 0.0
        %v2452 = vmax.f32 %v2436, 0.0
        %v2453 = vmax.f32 %v2437, 0.0
        %v2454 = vmax.f32 %v2438, 0.0
        %v2455 = vmax.f32 %v2439, 0.0
        %v2456 = vmax.f32 %v2440, 0.0
        %v2457 = vmax.f32 %v2441, 0.0
        %v2458 = vmax.f32 %v2442, 0.0
        %v2459 = vmax.f32 %v2443, 0.0
        %v2460 = vmax.f32 %v2444, 0.0
        %v2461 = vmax.f32 %v2445, 0.0
        %v2462 = vmax.f32 %v2446, 0.0
        %v2463 = vmax.f32 %v2447, 0.0
        %v2464 = vmax.f32 %v2448, 0.0
        %v2465 = vmax.f32 %v2449, 0.0
        %v2466 = vmax.f32 %v2450, 0.0
        %2483 = vrot.lane.b32.xlu0 %v2270, 112
        %v2484 = vpop.permute.xlu0 %2483
        %2485 = vrot.lane.b32.xlu0 %v2273, 112
        %v2486 = vpop.permute.xlu0 %2485
        %2487 = vrot.lane.b32.xlu0 %v2278, 112
        %v2488 = vpop.permute.xlu0 %2487
        %2489 = vrot.lane.b32.xlu0 %v2281, 112
        %v2490 = vpop.permute.xlu0 %2489
        %2491 = vrot.lane.b32.xlu0 %v2286, 112
        %v2492 = vpop.permute.xlu0 %2491
        %2493 = vrot.lane.b32.xlu0 %v2289, 112
        %v2494 = vpop.permute.xlu0 %2493
        %2495 = vrot.lane.b32.xlu0 %v2294, 112
        %v2496 = vpop.permute.xlu0 %2495
        %2497 = vrot.lane.b32.xlu0 %v2297, 112
        %v2498 = vpop.permute.xlu0 %2497
        %2499 = vrot.lane.b32.xlu0 %v2302, 112
        %v2500 = vpop.permute.xlu0 %2499
        %2501 = vrot.lane.b32.xlu0 %v2305, 112
        %v2502 = vpop.permute.xlu0 %2501
        %2503 = vrot.lane.b32.xlu0 %v2310, 112
        %v2504 = vpop.permute.xlu0 %2503
        %2505 = vrot.lane.b32.xlu0 %v2313, 112
        %v2506 = vpop.permute.xlu0 %2505
        %2507 = vrot.lane.b32.xlu0 %v2318, 112
        %v2508 = vpop.permute.xlu0 %2507
        %2509 = vrot.lane.b32.xlu0 %v2321, 112
        %v2510 = vpop.permute.xlu0 %2509
        %2511 = vrot.lane.b32.xlu0 %v2326, 112
        %v2512 = vpop.permute.xlu0 %2511
        %2513 = vrot.lane.b32.xlu0 %v2329, 112
        %v2514 = vpop.permute.xlu0 %2513
        %v2531 = vmul.f32 %v1770, %v2484
        %v2532 = vmul.f32 %v1771, %v2486
        %v2533 = vmul.f32 %v1772, %v2488
        %v2534 = vmul.f32 %v1773, %v2490
        %v2535 = vmul.f32 %v1774, %v2492
        %v2536 = vmul.f32 %v1775, %v2494
        %v2537 = vmul.f32 %v1776, %v2496
        %v2538 = vmul.f32 %v1777, %v2498
        %v2539 = vmul.f32 %v1778, %v2500
        %v2540 = vmul.f32 %v1779, %v2502
        %v2541 = vmul.f32 %v1780, %v2504
        %v2542 = vmul.f32 %v1781, %v2506
        %v2543 = vmul.f32 %v1782, %v2508
        %v2544 = vmul.f32 %v1783, %v2510
        %v2545 = vmul.f32 %v1784, %v2512
        %v2546 = vmul.f32 %v1785, %v2514
        %v2547 = vmul.f32 %v2531, 0.0033333334
        %v2548 = vmul.f32 %v2532, 0.0033333334
        %v2549 = vmul.f32 %v2533, 0.0033333334
        %v2550 = vmul.f32 %v2534, 0.0033333334
        %v2551 = vmul.f32 %v2535, 0.0033333334
        %v2552 = vmul.f32 %v2536, 0.0033333334
        %v2553 = vmul.f32 %v2537, 0.0033333334
        %v2554 = vmul.f32 %v2538, 0.0033333334
        %v2555 = vmul.f32 %v2539, 0.0033333334
        %v2556 = vmul.f32 %v2540, 0.0033333334
        %v2557 = vmul.f32 %v2541, 0.0033333334
        %v2558 = vmul.f32 %v2542, 0.0033333334
        %v2559 = vmul.f32 %v2543, 0.0033333334
        %v2560 = vmul.f32 %v2544, 0.0033333334
        %v2561 = vmul.f32 %v2545, 0.0033333334
        %v2562 = vmul.f32 %v2546, 0.0033333334
        %v2563 = vld [vmem:[#allocation3] sm:$0x1]
        %2565 = vset.pattern.permute.xlu0 0
        %2566 = vperm.xlu0 %2565, %v2547
        %v2567 = vpop.permute.xlu0 %2566
        %2570 = vset.pattern.permute.xlu0 0
        %2571 = vperm.xlu0 %2570, %v2548
        %v2572 = vpop.permute.xlu0 %2571
        %2575 = vset.pattern.permute.xlu0 0
        %2576 = vperm.xlu0 %2575, %v2549
        %v2577 = vpop.permute.xlu0 %2576
        %2580 = vset.pattern.permute.xlu0 0
        %2581 = vperm.xlu0 %2580, %v2550
        %v2582 = vpop.permute.xlu0 %2581
        %2585 = vset.pattern.permute.xlu0 0
        %2586 = vperm.xlu0 %2585, %v2551
        %v2587 = vpop.permute.xlu0 %2586
        %2590 = vset.pattern.permute.xlu0 0
        %2591 = vperm.xlu0 %2590, %v2552
        %v2592 = vpop.permute.xlu0 %2591
        %2595 = vset.pattern.permute.xlu0 0
        %2596 = vperm.xlu0 %2595, %v2553
        %v2597 = vpop.permute.xlu0 %2596
        %2600 = vset.pattern.permute.xlu0 0
        %2601 = vperm.xlu0 %2600, %v2554
        %v2602 = vpop.permute.xlu0 %2601
        %2605 = vset.pattern.permute.xlu0 0
        %2606 = vperm.xlu0 %2605, %v2555
        %v2607 = vpop.permute.xlu0 %2606
        %2610 = vset.pattern.permute.xlu0 0
        %2611 = vperm.xlu0 %2610, %v2556
        %v2612 = vpop.permute.xlu0 %2611
        %2615 = vset.pattern.permute.xlu0 0
        %2616 = vperm.xlu0 %2615, %v2557
        %v2617 = vpop.permute.xlu0 %2616
        %2620 = vset.pattern.permute.xlu0 0
        %2621 = vperm.xlu0 %2620, %v2558
        %v2622 = vpop.permute.xlu0 %2621
        %2625 = vset.pattern.permute.xlu0 0
        %2626 = vperm.xlu0 %2625, %v2559
        %v2627 = vpop.permute.xlu0 %2626
        %2630 = vset.pattern.permute.xlu0 0
        %2631 = vperm.xlu0 %2630, %v2560
        %v2632 = vpop.permute.xlu0 %2631
        %2635 = vset.pattern.permute.xlu0 0
        %2636 = vperm.xlu0 %2635, %v2561
        %v2637 = vpop.permute.xlu0 %2636
        %2640 = vset.pattern.permute.xlu0 0
        %2641 = vperm.xlu0 %2640, %v2562
        %v2642 = vpop.permute.xlu0 %2641
        %v2644 = vmul.f32 %v2451, %v2567
        %v2645 = vmul.f32 %v2452, %v2572
        %v2646 = vmul.f32 %v2453, %v2577
        %v2647 = vmul.f32 %v2454, %v2582
        %v2648 = vmul.f32 %v2455, %v2587
        %v2649 = vmul.f32 %v2456, %v2592
        %v2650 = vmul.f32 %v2457, %v2597
        %v2651 = vmul.f32 %v2458, %v2602
        %v2652 = vmul.f32 %v2459, %v2607
        %v2653 = vmul.f32 %v2460, %v2612
        %v2654 = vmul.f32 %v2461, %v2617
        %v2655 = vmul.f32 %v2462, %v2622
        %v2656 = vmul.f32 %v2463, %v2627
        %v2657 = vmul.f32 %v2464, %v2632
        %v2658 = vmul.f32 %v2465, %v2637
        %v2659 = vmul.f32 %v2466, %v2642
        %vm2660 = vcmask 130048
        %v2661 = vsel %vm2660, %v2644, 0.0
        %v2662 = vsel %vm2660, %v2645, 0.0
        %v2663 = vadd.f32 %v2661, %v2662
        %v2664 = vsel %vm2660, %v2646, 0.0
        %v2665 = vadd.f32 %v2663, %v2664
        %v2666 = vsel %vm2660, %v2647, 0.0
        %v2667 = vadd.f32 %v2665, %v2666
        %v2668 = vsel %vm2660, %v2648, 0.0
        %v2669 = vadd.f32 %v2667, %v2668
        %v2670 = vsel %vm2660, %v2649, 0.0
        %v2671 = vadd.f32 %v2669, %v2670
        %v2672 = vsel %vm2660, %v2650, 0.0
        %v2673 = vadd.f32 %v2671, %v2672
        %v2674 = vsel %vm2660, %v2651, 0.0
        %v2675 = vadd.f32 %v2673, %v2674
        %v2676 = vsel %vm2660, %v2652, 0.0
        %v2677 = vadd.f32 %v2675, %v2676
        %v2678 = vsel %vm2660, %v2653, 0.0
        %v2679 = vadd.f32 %v2677, %v2678
        %v2680 = vsel %vm2660, %v2654, 0.0
        %v2681 = vadd.f32 %v2679, %v2680
        %v2682 = vsel %vm2660, %v2655, 0.0
        %v2683 = vadd.f32 %v2681, %v2682
        %v2684 = vsel %vm2660, %v2656, 0.0
        %v2685 = vadd.f32 %v2683, %v2684
        %v2686 = vsel %vm2660, %v2657, 0.0
        %v2687 = vadd.f32 %v2685, %v2686
        %v2688 = vsel %vm2660, %v2658, 0.0
        %v2689 = vadd.f32 %v2687, %v2688
        %v2690 = vsel %vm2660, %v2659, 0.0
        %v2691 = vadd.f32 %v2689, %v2690
        %v2692 = vrot.slane %v2691, 4
        %v2693 = vadd.f32 %v2691, %v2692
        %v2694 = vrot.slane %v2693, 2
        %v2695 = vadd.f32 %v2693, %v2694
        %v2696 = vrot.slane %v2695, 1
        %v2697 = vadd.f32 %v2695, %v2696
        %v2698 = vadd.f32 %v2563, %v2697
        %vm2699 = vcmask 122880
        %2700 = vst.msk [vmem:[#allocation3] sm:$0x1] %vm2699, %v2698
        %p2701 = scmp.eq.s32.totalorder %s20, 2
        // Predicated region
        $region57: #{tpu_custom_call.1} parent=51 // pred_check
          %p2702 = pneg %p2701
        $region58: #{tpu_custom_call.1} parent=51 // pred_check_branch
          %2704 = sbr.rel (%p2702) target = $region60
        $region59: #{tpu_custom_call.1} parent=51 // pred_region
          %v2705 = vld [vmem:[#allocation3] sm:$0x1]
          %v2706 = vld [vmem:[%s6] sm:$0xff]
          %v2707 = vld [vmem:[%s6 + $0x8] sm:$0xff]
          %v2708 = vld [vmem:[%s7] sm:$0x1]
          %v2710 = vsel %vm2660, %v2705, 0
          %2712 = vmatprep.subr.mxu0 0.0
          %2713 = vmatpush1.msra.mxu0 0.0
          %2714 = vmatprep.subr.mxu0 0.0
          %2715 = vmatpush1.msra.mxu0 0.0
          %2716 = vmatprep.subr.mxu0 0.0
          %2717 = vmatpush1.msra.mxu0 0.0
          %2718 = vmatprep.subr.mxu0 0.0
          %2719 = vmatpush1.msra.mxu0 0.0
          %2720 = vmatprep.subr.mxu0 0.0
          %2721 = vmatpush1.msra.mxu0 0.0
          %2722 = vmatprep.subr.mxu0 0.0
          %2723 = vmatpush1.msra.mxu0 0.0
          %2724 = vmatprep.subr.mxu0 0.0
          %2725 = vmatpush1.msra.mxu0 0.0
          %2726 = vmatprep.subr.mxu0 0.0
          %2727 = vmatpush1.msra.mxu0 0.0
          %2728 = vmatprep.subr.mxu0 0.0
          %2729 = vmatpush1.msra.mxu0 0.0
          %2730 = vmatprep.subr.mxu0 0.0
          %2731 = vmatpush1.msra.mxu0 0.0
          %2732 = vmatprep.subr.mxu0 0.0
          %2733 = vmatpush1.msra.mxu0 0.0
          %2734 = vmatprep.subr.mxu0 0.0
          %2735 = vmatpush1.msra.mxu0 0.0
          %2736 = vmatprep.subr.mxu0 0.0
          %2737 = vmatpush1.msra.mxu0 0.0
          %2738 = vmatprep.subr.mxu0 0.0
          %2739 = vmatpush1.msra.mxu0 0.0
          %2740 = vmatprep.subr.mxu0 0.0
          %2741 = vmatpush1.msra.mxu0 %v2707
          %2742 = vmatprep.subr.mxu0 0.0
          %2743 = vmatpush1.msra.mxu0 %v2706
          %2744 = vmatprep.subr.mxu0 0.0
          %2745 = vmatpush2.msra.mxu0 0.0
          %2746 = vmatprep.subr.mxu0 0.0
          %2747 = vmatpush2.msra.mxu0 0.0
          %2748 = vmatprep.subr.mxu0 0.0
          %2749 = vmatpush2.msra.mxu0 0.0
          %2750 = vmatprep.subr.mxu0 0.0
          %2751 = vmatpush2.msra.mxu0 0.0
          %2752 = vmatprep.subr.mxu0 0.0
          %2753 = vmatpush2.msra.mxu0 0.0
          %2754 = vmatprep.subr.mxu0 0.0
          %2755 = vmatpush2.msra.mxu0 0.0
          %2756 = vmatprep.subr.mxu0 0.0
          %2757 = vmatpush2.msra.mxu0 0.0
          %2758 = vmatprep.subr.mxu0 0.0
          %2759 = vmatpush2.msra.mxu0 0.0
          %2760 = vmatprep.subr.mxu0 0.0
          %2761 = vmatpush2.msra.mxu0 0.0
          %2762 = vmatprep.subr.mxu0 0.0
          %2763 = vmatpush2.msra.mxu0 0.0
          %2764 = vmatprep.subr.mxu0 0.0
          %2765 = vmatpush2.msra.mxu0 0.0
          %2766 = vmatprep.subr.mxu0 0.0
          %2767 = vmatpush2.msra.mxu0 0.0
          %2768 = vmatprep.subr.mxu0 0.0
          %2769 = vmatpush2.msra.mxu0 0.0
          %2770 = vmatprep.subr.mxu0 0.0
          %2771 = vmatpush2.msra.mxu0 0.0
          %2772 = vmatprep.subr.mxu0 0.0
          %2773 = vmatpush2.msra.mxu0 0.0
          %2774 = vmatprep.subr.mxu0 0.0
          %2775 = vmatpush2.msra.mxu0 0.0
          %2776 = vmatprep.mubr.f32.mxu0 0.0
          %2777 = vmatmul.mubr.f32.gmra.mxu0 %v2710
          %v2778 = vpop.f32.mrf.mxu0
          %v2779 = vadd.f32 %v2708, %v2778
          %v2780 = vpop.f32.mrf.mxu0
          %2781 = vdwg.mxu0
          %vm2782 = vcmask 57344
          %2783 = vst.msk [vmem:[#allocation4] sm:$0x1] %vm2782, %v2779
        $region60: #{tpu_custom_call.1} parent=51 // pred_fallthru
          _
        // Predicated region
        $region61: #{tpu_custom_call.1} parent=51 // pred_check
          %p2784 = pneg %p206
        $region62: #{tpu_custom_call.1} parent=51 // pred_check_branch
          %2786 = sbr.rel (%p2784) target = $region64
        $region63: #{tpu_custom_call.1} parent=51 // pred_region
          %s2788 = ssub.s32 16, 16
          %2789 = vsyncadd [#allocation5], %s2788
          %s2791 = sshll.u32 [#allocation4], 4
          %s2792 = int_to_ptr.vmem [resolvable:$true] %s2791
          %2794 = dma.vmem_to_hbm [thread:$0]  %s2792, 16, %s8, [#allocation5]
        $region64: #{tpu_custom_call.1} parent=51 // pred_fallthru
          _
        // Predicated region
        $region65: #{tpu_custom_call.1} parent=51 // pred_check
          %p2795 = pneg %p206
        $region66: #{tpu_custom_call.1} parent=51 // pred_check_branch
          %2797 = sbr.rel (%p2795) target = $region68
        $region67: #{tpu_custom_call.1} parent=51 // pred_region
          %2798 = dma.done [#allocation5], 16
        $region68: #{tpu_custom_call.1} parent=51 // pred_fallthru
          _
      $region52: #{tpu_custom_call.1} parent=5 // pred_fallthru
        _
      %p2799 = scmp.le.s32.totalorder 2, %s15
      // Predicated region
      $region69: #{tpu_custom_call.1} parent=5 // pred_check
        %p2800 = pneg %p2799
      $region70: #{tpu_custom_call.1} parent=5 // pred_check_branch
        %2802 = sbr.rel (%p2800) target = $region72
      $region71: #{tpu_custom_call.1} parent=5 // pred_region
        %s2803 = ssub.s32 %s15, 2
      $region72: #{tpu_custom_call.1} parent=5 // pred_fallthru
        _
    $region6: #{tpu_custom_call.1} parent=1 // loop_footer
      %s19 = sadd.s32 1, %s15
    $region7: #{tpu_custom_call.1} parent=1 // loop_footer_branch
      %14 = sbr.rel target = $region3
    $region8: #{tpu_custom_call.1} parent=1 // loop_exit
      _
    %2804 = vsyncpa [#allocation5], 1
    %s2805 = scalar_lea.sflag [#allocation5], 1
    %2806 = vsyncpa %s2805, 1

</llo_original>
